<compile_context>
chip_gen: v7x
topology: tpu7x:2x2x1
jax: 0.10.0
libtpu: 0.0.40
codegen_flags: <defaults>
</compile_context>

<pallas_src>
import jax
import jax.numpy as jnp
from jax.experimental import pallas as pl
from jax.experimental.pallas import tpu as pltpu

_SUB = 256                 # rows per inner sub-chunk (kept resident in vregs)
_MIN_PALLAS_BATCH = 256    # below this, the fused XLA path wins


def _round_up(x, m):
    return ((x + m - 1) // m) * m


def _mlp_kernel(x_ref, w1_ref, b1_ref, w2_ref, b2_ref, w3_ref, b3_ref, o_ref):
    # Weights / biases are tiny; load once per grid step and keep in vregs.
    w1 = w1_ref[...]
    w2 = w2_ref[...]
    w3 = w3_ref[...]
    b1 = b1_ref[...]
    b2 = b2_ref[...]
    b3 = b3_ref[...]

    n_sub = x_ref.shape[0] // _SUB  # static: tile_b is a multiple of _SUB

    # Static unrolled sub-chunk loop: h1/h2 for 256 rows fit in the vreg file,
    # so the only VMEM traffic is the x block in and the out block out.
    for j in range(n_sub):
        r0 = j * _SUB
        x = x_ref[pl.ds(r0, _SUB), :]                               # bf16

        h1 = jnp.dot(x, w1, preferred_element_type=jnp.float32) + b1
        h1 = jnp.where(h1 > 0, h1, 0.01 * h1)                       # leaky_relu(0.01), f32

        h2 = jnp.dot(h1.astype(w2.dtype), w2,
                     preferred_element_type=jnp.float32) + b2
        h2 = jnp.where(h2 > 0, h2, 0.01 * h2)                       # leaky_relu(0.01), f32

        h3 = jnp.dot(h2.astype(w3.dtype), w3,
                     preferred_element_type=jnp.float32) + b3
        o_ref[pl.ds(r0, _SUB), :] = jnp.tanh(h3)                    # f32 store


def _forward_ref(obs_2, params, compute_dtype=jnp.bfloat16):
    """Pure-JAX forward (same bf16-input / f32-accumulate recipe as the kernel).
    Used both as the tiny-batch fallback and as the test reference."""
    x = obs_2.astype(compute_dtype)
    w1 = params["w1"].astype(compute_dtype)
    w2 = params["w2"].astype(compute_dtype)
    w3 = params["w3"].astype(compute_dtype)
    b1 = params["b1"].astype(jnp.float32)
    b2 = params["b2"].astype(jnp.float32)
    b3 = params["b3"].astype(jnp.float32)

    h1 = jnp.dot(x, w1, preferred_element_type=jnp.float32) + b1
    h1 = jnp.where(h1 > 0, h1, 0.01 * h1)
    h2 = jnp.dot(h1.astype(compute_dtype), w2, preferred_element_type=jnp.float32) + b2
    h2 = jnp.where(h2 > 0, h2, 0.01 * h2)
    h3 = jnp.dot(h2.astype(compute_dtype), w3, preferred_element_type=jnp.float32) + b3
    return jnp.tanh(h3)


def feedforward_nn_act_2(obs_2, params, *, tile_b=512):
    """Forward pass. obs_2: (B, in_dim) float32. params: dict of w1,b1,w2,b2,w3,b3."""
    squeeze = False
    if obs_2.ndim == 1:                      # single observation, like torch.nn.Linear
        obs_2 = obs_2[None, :]
        squeeze = True

    w1, b1 = params["w1"], params["b1"]
    w2, b2 = params["w2"], params["b2"]
    w3, b3 = params["w3"], params["b3"]
    B, in_dim = obs_2.shape
    hid = w1.shape[1]
    out_dim = w3.shape[1]

    if B < _MIN_PALLAS_BATCH:
        # Tiny batch: pallas_call fixed overhead dominates; use fused XLA path.
        out = _forward_ref(obs_2, params)
        return out[0] if squeeze else out

    # bf16 for HBM->VMEM + MXU inputs; f32 accumulation & activations in-kernel.
    x = obs_2.astype(jnp.bfloat16)
    w1b = w1.astype(jnp.bfloat16)
    w2b = w2.astype(jnp.bfloat16)
    w3b = w3.astype(jnp.bfloat16)
    b1f = b1.astype(jnp.float32)
    b2f = b2.astype(jnp.float32)
    b3f = b3.astype(jnp.float32)

    # Tile: multiple of the 256-row sub-chunk; at most covers the whole batch.
    tb = max(_SUB, min(int(tile_b), _round_up(B, _SUB)))
    tb = _round_up(tb, _SUB)

    # Pad batch to a multiple of the tile -> no partial-block corner cases.
    Bp = _round_up(B, tb)
    if Bp != B:
        x = jnp.pad(x, ((0, Bp - B), (0, 0)))

    grid = (pl.cdiv(Bp, tb),)

    flops = 2 * Bp * (in_dim * hid + hid * hid + hid * out_dim)
    bytes_accessed = (
        Bp * in_dim * 2 + Bp * out_dim * 4            # activations in / out
        + (in_dim * hid + hid * hid + hid * out_dim) * 2   # bf16 weights
        + (2 * hid + out_dim) * 4                     # f32 biases
    )
    cost = pl.CostEstimate(
        flops=flops,
        transcendentals=Bp * out_dim,                 # tanh
        bytes_accessed=bytes_accessed,
    )

    out = pl.pallas_call(
        _mlp_kernel,
        out_shape=jax.ShapeDtypeStruct((Bp, out_dim), jnp.float32),
        grid_spec=pltpu.PrefetchScalarGridSpec(
            num_scalar_prefetch=0,
            grid=grid,
            in_specs=[
                # batch-tiled input
                pl.BlockSpec((tb, in_dim), lambda i: (i, 0)),
                # weights/biases: full blocks, broadcast over batch tiles
                pl.BlockSpec((in_dim, hid), lambda i: (0, 0)),
                pl.BlockSpec((1, hid), lambda i: (0, 0)),
                pl.BlockSpec((hid, hid), lambda i: (0, 0)),
                pl.BlockSpec((1, hid), lambda i: (0, 0)),
                pl.BlockSpec((hid, out_dim), lambda i: (0, 0)),
                pl.BlockSpec((1, out_dim), lambda i: (0, 0)),
            ],
            out_specs=pl.BlockSpec((tb, out_dim), lambda i: (i, 0)),
        ),
        compiler_params=pltpu.CompilerParams(
            dimension_semantics=("parallel",),
        ),
        cost_estimate=cost,
    )(x, w1b, b1f, w2b, b2f, w3b, b3f)

    if Bp != B:
        out = out[:B]
    return out[0] if squeeze else out


def init_params(key, in_dim, out_dim, hid=64):
    """Deterministic init mimicking torch.nn.Linear default (U(-1/sqrt(fan_in), 1/sqrt(fan_in)))."""
    ks = jax.random.split(key, 6)

    def linear(kw, kb, fan_in, fan_out):
        bound = 1.0 / jnp.sqrt(jnp.float32(fan_in))
        w = jax.random.uniform(kw, (fan_in, fan_out), jnp.float32, -bound, bound)
        b = jax.random.uniform(kb, (1, fan_out), jnp.float32, -bound, bound)
        return w, b

    w1, b1 = linear(ks[0], ks[1], in_dim, hid)
    w2, b2 = linear(ks[2], ks[3], hid, hid)
    w3, b3 = linear(ks[4], ks[5], hid, out_dim)
    return {"w1": w1, "b1": b1, "w2": w2, "b2": b2, "w3": w3, "b3": b3}


if __name__ == "__main__":
    key = jax.random.PRNGKey(0)
    k_x, k_p = jax.random.split(key)

    in_dim, out_dim = 16, 4
    params = init_params(k_p, in_dim, out_dim)

    # 1) Pallas path: batch large enough to exercise the tiled kernel.
    B = 512
    obs_2 = jax.random.normal(k_x, (B, in_dim), jnp.float32)
    out = jax.block_until_ready(feedforward_nn_act_2(obs_2, params))
    assert out.shape == (B, out_dim)

    ref = _forward_ref(obs_2, params)                       # same bf16 recipe
    assert jnp.allclose(out, ref, atol=1e-4, rtol=1e-4), float(
        jnp.max(jnp.abs(out - ref)))

    ref_f32 = _forward_ref(obs_2, params, compute_dtype=jnp.float32)
    assert jnp.allclose(out, ref_f32, atol=5e-2), float(    # module semantics
        jnp.max(jnp.abs(out - ref_f32)))

    # 2) Non-divisible batch -> padded tile path.
    B2 = 300
    obs_b = jax.random.normal(jax.random.PRNGKey(1), (B2, in_dim), jnp.float32)
    out2 = jax.block_until_ready(feedforward_nn_act_2(obs_b, params))
    assert out2.shape == (B2, out_dim)
    ref2 = _forward_ref(obs_b, params)
    assert jnp.allclose(out2, ref2, atol=1e-4, rtol=1e-4)

    # 3) Tiny batch -> fused XLA fallback (no Pallas call).
    obs_s = jax.random.normal(jax.random.PRNGKey(2), (8, in_dim), jnp.float32)
    out3 = jax.block_until_ready(feedforward_nn_act_2(obs_s, params))
    assert out3.shape == (8, out_dim)

    print("KERNEL_OK")
</pallas_src>

<mosaic_0001>
module attributes {stable_mosaic.version = 11 : i64} {
  func.func @_mlp_kernel(%arg0: i32, %arg1: memref<512x16xbf16, #tpu.memory_space<vmem>>, %arg2: memref<16x64xbf16, #tpu.memory_space<vmem>>, %arg3: memref<1x64xf32, #tpu.memory_space<vmem>>, %arg4: memref<64x64xbf16, #tpu.memory_space<vmem>>, %arg5: memref<1x64xf32, #tpu.memory_space<vmem>>, %arg6: memref<64x4xbf16, #tpu.memory_space<vmem>>, %arg7: memref<1x4xf32, #tpu.memory_space<vmem>>, %arg8: memref<512x4xf32, #tpu.memory_space<vmem>>) attributes {dimension_semantics = [#tpu.dimension_semantics<parallel>], iteration_bounds = array<i64: 1>, scalar_prefetch = 0 : i64, scratch_operands = 0 : i64, tpu.core_type = #tpu.core_type<tc>, window_params = [{transform_indices = @transform_0, window_bounds = array<i64: 512, 16>}, {pipeline_mode = #tpu.pipeline_mode<synchronous>, transform_indices = @transform_1, window_bounds = array<i64: 16, 64>}, {pipeline_mode = #tpu.pipeline_mode<synchronous>, transform_indices = @transform_2, window_bounds = array<i64: 1, 64>}, {pipeline_mode = #tpu.pipeline_mode<synchronous>, transform_indices = @transform_3, window_bounds = array<i64: 64, 64>}, {pipeline_mode = #tpu.pipeline_mode<synchronous>, transform_indices = @transform_4, window_bounds = array<i64: 1, 64>}, {pipeline_mode = #tpu.pipeline_mode<synchronous>, transform_indices = @transform_5, window_bounds = array<i64: 64, 4>}, {pipeline_mode = #tpu.pipeline_mode<synchronous>, transform_indices = @transform_6, window_bounds = array<i64: 1, 4>}, {transform_indices = @transform_7, window_bounds = array<i64: 512, 4>}]} {
    %c0 = arith.constant 0 : index
    %c0_0 = arith.constant 0 : index
    %0 = vector.load %arg2[%c0, %c0_0] : memref<16x64xbf16, #tpu.memory_space<vmem>>, vector<16x64xbf16>
    %c0_1 = arith.constant 0 : index
    %c0_2 = arith.constant 0 : index
    %1 = vector.load %arg4[%c0_1, %c0_2] : memref<64x64xbf16, #tpu.memory_space<vmem>>, vector<64x64xbf16>
    %c0_3 = arith.constant 0 : index
    %c0_4 = arith.constant 0 : index
    %2 = vector.load %arg6[%c0_3, %c0_4] : memref<64x4xbf16, #tpu.memory_space<vmem>>, vector<64x4xbf16>
    %c0_5 = arith.constant 0 : index
    %c0_6 = arith.constant 0 : index
    %3 = vector.load %arg3[%c0_5, %c0_6] : memref<1x64xf32, #tpu.memory_space<vmem>>, vector<1x64xf32>
    %c0_7 = arith.constant 0 : index
    %c0_8 = arith.constant 0 : index
    %4 = vector.load %arg5[%c0_7, %c0_8] : memref<1x64xf32, #tpu.memory_space<vmem>>, vector<1x64xf32>
    %c0_9 = arith.constant 0 : index
    %c0_10 = arith.constant 0 : index
    %5 = vector.load %arg7[%c0_9, %c0_10] : memref<1x4xf32, #tpu.memory_space<vmem>>, vector<1x4xf32>
    %c0_11 = arith.constant 0 : index
    %c0_12 = arith.constant 0 : index
    %6 = vector.load %arg1[%c0_11, %c0_12] : memref<512x16xbf16, #tpu.memory_space<vmem>>, vector<256x16xbf16>
    %cst = arith.constant dense<0.000000e+00> : vector<256x64xf32>
    %7 = tpu.matmul %6, %0, %cst {dimension_numbers = #tpu.dot_dimension_numbers<[1], [0], [0], [1], [0, 0, 1, 1], [], []>} : vector<256x16xbf16>, vector<16x64xbf16>, vector<256x64xf32> -> vector<256x64xf32>
    %8 = vector.broadcast %3 : vector<1x64xf32> to vector<256x64xf32>
    %9 = arith.addf %7, %8 : vector<256x64xf32>
    %cst_13 = arith.constant 0.000000e+00 : f32
    %10 = vector.broadcast %cst_13 : f32 to vector<256x64xf32>
    %11 = arith.cmpf ogt, %9, %10 : vector<256x64xf32>
    %cst_14 = arith.constant 0.00999999977 : f32
    %12 = vector.broadcast %cst_14 : f32 to vector<256x64xf32>
    %13 = arith.mulf %12, %9 : vector<256x64xf32>
    %14 = arith.select %11, %9, %13 : vector<256x64xi1>, vector<256x64xf32>
    %15 = arith.truncf %14 : vector<256x64xf32> to vector<256x64xbf16>
    %cst_15 = arith.constant dense<0.000000e+00> : vector<256x64xf32>
    %16 = tpu.matmul %15, %1, %cst_15 {dimension_numbers = #tpu.dot_dimension_numbers<[1], [0], [0], [1], [0, 0, 1, 1], [], []>} : vector<256x64xbf16>, vector<64x64xbf16>, vector<256x64xf32> -> vector<256x64xf32>
    %17 = vector.broadcast %4 : vector<1x64xf32> to vector<256x64xf32>
    %18 = arith.addf %16, %17 : vector<256x64xf32>
    %cst_16 = arith.constant 0.000000e+00 : f32
    %19 = vector.broadcast %cst_16 : f32 to vector<256x64xf32>
    %20 = arith.cmpf ogt, %18, %19 : vector<256x64xf32>
    %cst_17 = arith.constant 0.00999999977 : f32
    %21 = vector.broadcast %cst_17 : f32 to vector<256x64xf32>
    %22 = arith.mulf %21, %18 : vector<256x64xf32>
    %23 = arith.select %20, %18, %22 : vector<256x64xi1>, vector<256x64xf32>
    %24 = arith.truncf %23 : vector<256x64xf32> to vector<256x64xbf16>
    %cst_18 = arith.constant dense<0.000000e+00> : vector<256x4xf32>
    %25 = tpu.matmul %24, %2, %cst_18 {dimension_numbers = #tpu.dot_dimension_numbers<[1], [0], [0], [1], [0, 0, 1, 1], [], []>} : vector<256x64xbf16>, vector<64x4xbf16>, vector<256x4xf32> -> vector<256x4xf32>
    %26 = vector.broadcast %5 : vector<1x4xf32> to vector<256x4xf32>
    %27 = arith.addf %25, %26 : vector<256x4xf32>
    %28 = math.tanh %27 : vector<256x4xf32>
    %c0_19 = arith.constant 0 : index
    %c0_20 = arith.constant 0 : index
    %29 = vector.load %arg8[%c0_19, %c0_20] : memref<512x4xf32, #tpu.memory_space<vmem>>, vector<256x4xf32>
    tpu.vector_store %arg8[%c0_19, %c0_20], %28 {strides = array<i32>} : memref<512x4xf32, #tpu.memory_space<vmem>>, vector<256x4xf32>,
    %c256 = arith.constant 256 : index
    %c0_21 = arith.constant 0 : index
    %30 = vector.load %arg1[%c256, %c0_21] : memref<512x16xbf16, #tpu.memory_space<vmem>>, vector<256x16xbf16>
    %cst_22 = arith.constant dense<0.000000e+00> : vector<256x64xf32>
    %31 = tpu.matmul %30, %0, %cst_22 {dimension_numbers = #tpu.dot_dimension_numbers<[1], [0], [0], [1], [0, 0, 1, 1], [], []>} : vector<256x16xbf16>, vector<16x64xbf16>, vector<256x64xf32> -> vector<256x64xf32>
    %32 = vector.broadcast %3 : vector<1x64xf32> to vector<256x64xf32>
    %33 = arith.addf %31, %32 : vector<256x64xf32>
    %cst_23 = arith.constant 0.000000e+00 : f32
    %34 = vector.broadcast %cst_23 : f32 to vector<256x64xf32>
    %35 = arith.cmpf ogt, %33, %34 : vector<256x64xf32>
    %cst_24 = arith.constant 0.00999999977 : f32
    %36 = vector.broadcast %cst_24 : f32 to vector<256x64xf32>
    %37 = arith.mulf %36, %33 : vector<256x64xf32>
    %38 = arith.select %35, %33, %37 : vector<256x64xi1>, vector<256x64xf32>
    %39 = arith.truncf %38 : vector<256x64xf32> to vector<256x64xbf16>
    %cst_25 = arith.constant dense<0.000000e+00> : vector<256x64xf32>
    %40 = tpu.matmul %39, %1, %cst_25 {dimension_numbers = #tpu.dot_dimension_numbers<[1], [0], [0], [1], [0, 0, 1, 1], [], []>} : vector<256x64xbf16>, vector<64x64xbf16>, vector<256x64xf32> -> vector<256x64xf32>
    %41 = vector.broadcast %4 : vector<1x64xf32> to vector<256x64xf32>
    %42 = arith.addf %40, %41 : vector<256x64xf32>
    %cst_26 = arith.constant 0.000000e+00 : f32
    %43 = vector.broadcast %cst_26 : f32 to vector<256x64xf32>
    %44 = arith.cmpf ogt, %42, %43 : vector<256x64xf32>
    %cst_27 = arith.constant 0.00999999977 : f32
    %45 = vector.broadcast %cst_27 : f32 to vector<256x64xf32>
    %46 = arith.mulf %45, %42 : vector<256x64xf32>
    %47 = arith.select %44, %42, %46 : vector<256x64xi1>, vector<256x64xf32>
    %48 = arith.truncf %47 : vector<256x64xf32> to vector<256x64xbf16>
    %cst_28 = arith.constant dense<0.000000e+00> : vector<256x4xf32>
    %49 = tpu.matmul %48, %2, %cst_28 {dimension_numbers = #tpu.dot_dimension_numbers<[1], [0], [0], [1], [0, 0, 1, 1], [], []>} : vector<256x64xbf16>, vector<64x4xbf16>, vector<256x4xf32> -> vector<256x4xf32>
    %50 = vector.broadcast %5 : vector<1x4xf32> to vector<256x4xf32>
    %51 = arith.addf %49, %50 : vector<256x4xf32>
    %52 = math.tanh %51 : vector<256x4xf32>
    %c256_29 = arith.constant 256 : index
    %c0_30 = arith.constant 0 : index
    %53 = vector.load %arg8[%c256_29, %c0_30] : memref<512x4xf32, #tpu.memory_space<vmem>>, vector<256x4xf32>
    tpu.vector_store %arg8[%c256_29, %c0_30], %52 {strides = array<i32>} : memref<512x4xf32, #tpu.memory_space<vmem>>, vector<256x4xf32>,
    return
  }
  func.func @transform_0(%arg0: i32) -> (i32, i32) {
    %c0_i32 = arith.constant 0 : i32
    %c0_i32_0 = arith.constant 0 : i32
    return %arg0, %c0_i32 : i32, i32
  }
  func.func @transform_1(%arg0: i32) -> (i32, i32) {
    %c0_i32 = arith.constant 0 : i32
    %c0_i32_0 = arith.constant 0 : i32
    %c0_i32_1 = arith.constant 0 : i32
    return %c0_i32, %c0_i32_0 : i32, i32
  }
  func.func @transform_2(%arg0: i32) -> (i32, i32) {
    %c0_i32 = arith.constant 0 : i32
    %c0_i32_0 = arith.constant 0 : i32
    %c0_i32_1 = arith.constant 0 : i32
    return %c0_i32, %c0_i32_0 : i32, i32
  }
  func.func @transform_3(%arg0: i32) -> (i32, i32) {
    %c0_i32 = arith.constant 0 : i32
    %c0_i32_0 = arith.constant 0 : i32
    %c0_i32_1 = arith.constant 0 : i32
    return %c0_i32, %c0_i32_0 : i32, i32
  }
  func.func @transform_4(%arg0: i32) -> (i32, i32) {
    %c0_i32 = arith.constant 0 : i32
    %c0_i32_0 = arith.constant 0 : i32
    %c0_i32_1 = arith.constant 0 : i32
    return %c0_i32, %c0_i32_0 : i32, i32
  }
  func.func @transform_5(%arg0: i32) -> (i32, i32) {
    %c0_i32 = arith.constant 0 : i32
    %c0_i32_0 = arith.constant 0 : i32
    %c0_i32_1 = arith.constant 0 : i32
    return %c0_i32, %c0_i32_0 : i32, i32
  }
  func.func @transform_6(%arg0: i32) -> (i32, i32) {
    %c0_i32 = arith.constant 0 : i32
    %c0_i32_0 = arith.constant 0 : i32
    %c0_i32_1 = arith.constant 0 : i32
    return %c0_i32, %c0_i32_0 : i32, i32
  }
  func.func @transform_7(%arg0: i32) -> (i32, i32) {
    %c0_i32 = arith.constant 0 : i32
    %c0_i32_0 = arith.constant 0 : i32
    return %arg0, %c0_i32 : i32, i32
  }
}

</mosaic_0001>

<llo_original>
// kernel: tpu_custom_call.1
$region0: #{tpu_custom_call.1}
  #allocation0 [shape = 'u32[]', space=smem, size = 0x4, offset = 0x4, fixed_abs, tag = 'smem constant byte address 0x4 - core index']
  #allocation1 [shape = 'u32[144,128]{1,0:T(1,128)}', space=vmem, size = 0x12000, scoped, tag = 'internal scratch']
  %s0 = inlined_call_operand.vmem [shape: bf16[512,16], index: 0, kind: input, shape index: {}]
  %s1 = inlined_call_operand.vmem [shape: bf16[16,64], index: 1, kind: input, shape index: {}]
  %s2 = inlined_call_operand.vmem [shape: f32[1,64], index: 2, kind: input, shape index: {}]
  %s3 = inlined_call_operand.vmem [shape: bf16[64,64], index: 3, kind: input, shape index: {}]
  %s4 = inlined_call_operand.vmem [shape: f32[1,64], index: 4, kind: input, shape index: {}]
  %s5 = inlined_call_operand.vmem [shape: bf16[64,4], index: 5, kind: input, shape index: {}]
  %s6 = inlined_call_operand.vmem [shape: f32[1,4], index: 6, kind: input, shape index: {}]
  %s7 = inlined_call_operand.vmem [shape: f32[512,4], index: 7, kind: output, shape index: {}]
  %s8 = sld [smem:[#allocation0]]
  $region38: #{tpu_custom_call.1} parent=0
    _
  %s10 = ssub.s32 1, %s8
  %s11 = scalar_select 0, %s10, %s8
  // Predicated region
  $region2: #{tpu_custom_call.1} parent=0 // pred_check
    _
  $region3: #{tpu_custom_call.1} parent=0 // pred_check_branch
    %13 = sbr.rel (0) target = $region5
  $region4: #{tpu_custom_call.1} parent=0 // pred_region
    _
  $region5: #{tpu_custom_call.1} parent=0 // pred_fallthru
    _
  // Predicated region
  $region6: #{tpu_custom_call.1} parent=0 // pred_check
    _
  $region7: #{tpu_custom_call.1} parent=0 // pred_check_branch
    %15 = sbr.rel (0) target = $region9
  $region8: #{tpu_custom_call.1} parent=0 // pred_region
    _
  $region9: #{tpu_custom_call.1} parent=0 // pred_fallthru
    _
  // Predicated region
  $region10: #{tpu_custom_call.1} parent=0 // pred_check
    _
  $region11: #{tpu_custom_call.1} parent=0 // pred_check_branch
    %17 = sbr.rel (0) target = $region13
  $region12: #{tpu_custom_call.1} parent=0 // pred_region
    _
  $region13: #{tpu_custom_call.1} parent=0 // pred_fallthru
    _
  // Predicated region
  $region14: #{tpu_custom_call.1} parent=0 // pred_check
    _
  $region15: #{tpu_custom_call.1} parent=0 // pred_check_branch
    %19 = sbr.rel (0) target = $region17
  $region16: #{tpu_custom_call.1} parent=0 // pred_region
    _
  $region17: #{tpu_custom_call.1} parent=0 // pred_fallthru
    _
  // Predicated region
  $region18: #{tpu_custom_call.1} parent=0 // pred_check
    _
  $region19: #{tpu_custom_call.1} parent=0 // pred_check_branch
    %21 = sbr.rel (0) target = $region21
  $region20: #{tpu_custom_call.1} parent=0 // pred_region
    _
  $region21: #{tpu_custom_call.1} parent=0 // pred_fallthru
    _
  // Predicated region
  $region22: #{tpu_custom_call.1} parent=0 // pred_check
    _
  $region23: #{tpu_custom_call.1} parent=0 // pred_check_branch
    %23 = sbr.rel (0) target = $region25
  $region24: #{tpu_custom_call.1} parent=0 // pred_region
    _
  $region25: #{tpu_custom_call.1} parent=0 // pred_fallthru
    _
  // Predicated region
  $region26: #{tpu_custom_call.1} parent=0 // pred_check
    _
  $region27: #{tpu_custom_call.1} parent=0 // pred_check_branch
    %25 = sbr.rel (0) target = $region29
  $region28: #{tpu_custom_call.1} parent=0 // pred_region
    _
  $region29: #{tpu_custom_call.1} parent=0 // pred_fallthru
    _
  %v27 = vld [vmem:[%s1] sm:$0xf]
  %v28 = vld [vmem:[%s1 + $0x4] sm:$0xf]
  %v29 = vld [vmem:[%s3] sm:$0xf]
  %v30 = vld [vmem:[%s3 + $0x4] sm:$0xf]
  %v31 = vld [vmem:[%s3 + $0x8] sm:$0xf]
  %v32 = vld [vmem:[%s3 + $0xc] sm:$0xf]
  %v33 = vld [vmem:[%s3 + $0x10] sm:$0xf]
  %v34 = vld [vmem:[%s3 + $0x14] sm:$0xf]
  %v35 = vld [vmem:[%s3 + $0x18] sm:$0xf]
  %v36 = vld [vmem:[%s3 + $0x1c] sm:$0xf]
  %v37 = vld [vmem:[%s5] sm:$0xf]
  %v38 = vld [vmem:[%s5 + $0x4] sm:$0xf]
  %v39 = vld [vmem:[%s5 + $0x8] sm:$0xf]
  %v40 = vld [vmem:[%s5 + $0xc] sm:$0xf]
  %v41 = vld [vmem:[%s5 + $0x10] sm:$0xf]
  %v42 = vld [vmem:[%s5 + $0x14] sm:$0xf]
  %v43 = vld [vmem:[%s5 + $0x18] sm:$0xf]
  %v44 = vld [vmem:[%s5 + $0x1c] sm:$0xf]
  %v45 = vld [vmem:[%s2] sm:$0x1]
  %v46 = vld [vmem:[%s4] sm:$0x1]
  %v47 = vld [vmem:[%s6] sm:$0x1]
  %v48 = vld [vmem:[%s0] sm:$0xf]
  %v49 = vld [vmem:[%s0 + $0x4] sm:$0xf]
  %v50 = vld [vmem:[%s0 + $0x8] sm:$0xf]
  %v51 = vld [vmem:[%s0 + $0xc] sm:$0xf]
  %v52 = vld [vmem:[%s0 + $0x10] sm:$0xf]
  %v53 = vld [vmem:[%s0 + $0x14] sm:$0xf]
  %v54 = vld [vmem:[%s0 + $0x18] sm:$0xf]
  %v55 = vld [vmem:[%s0 + $0x1c] sm:$0xf]
  %v56 = vld [vmem:[%s0 + $0x20] sm:$0xf]
  %v57 = vld [vmem:[%s0 + $0x24] sm:$0xf]
  %v58 = vld [vmem:[%s0 + $0x28] sm:$0xf]
  %v59 = vld [vmem:[%s0 + $0x2c] sm:$0xf]
  %v60 = vld [vmem:[%s0 + $0x30] sm:$0xf]
  %v61 = vld [vmem:[%s0 + $0x34] sm:$0xf]
  %v62 = vld [vmem:[%s0 + $0x38] sm:$0xf]
  %v63 = vld [vmem:[%s0 + $0x3c] sm:$0xf]
  %v64 = vld [vmem:[%s0 + $0x40] sm:$0xf]
  %v65 = vld [vmem:[%s0 + $0x44] sm:$0xf]
  %v66 = vld [vmem:[%s0 + $0x48] sm:$0xf]
  %v67 = vld [vmem:[%s0 + $0x4c] sm:$0xf]
  %v68 = vld [vmem:[%s0 + $0x50] sm:$0xf]
  %v69 = vld [vmem:[%s0 + $0x54] sm:$0xf]
  %v70 = vld [vmem:[%s0 + $0x58] sm:$0xf]
  %v71 = vld [vmem:[%s0 + $0x5c] sm:$0xf]
  %v72 = vld [vmem:[%s0 + $0x60] sm:$0xf]
  %v73 = vld [vmem:[%s0 + $0x64] sm:$0xf]
  %v74 = vld [vmem:[%s0 + $0x68] sm:$0xf]
  %v75 = vld [vmem:[%s0 + $0x6c] sm:$0xf]
  %v76 = vld [vmem:[%s0 + $0x70] sm:$0xf]
  %v77 = vld [vmem:[%s0 + $0x74] sm:$0xf]
  %v78 = vld [vmem:[%s0 + $0x78] sm:$0xf]
  %v79 = vld [vmem:[%s0 + $0x7c] sm:$0xf]
  %v81 = vlaneseq
  %v82 = vshrl.u32 %v81, 7
  %v83 = vsub.s32 0, %v82
  %v84 = vrot.slane %v45, %v83
  %v118 = vunpack.c.l.b16 %v48
  %v119 = vunpack.c.l.b16 %v49
  %v120 = vunpack.c.l.b16 %v50
  %v121 = vunpack.c.l.b16 %v51
  %v122 = vunpack.c.l.b16 %v52
  %v123 = vunpack.c.l.b16 %v53
  %v124 = vunpack.c.l.b16 %v54
  %v125 = vunpack.c.l.b16 %v55
  %v126 = vunpack.c.l.b16 %v56
  %v127 = vunpack.c.l.b16 %v57
  %v128 = vunpack.c.l.b16 %v58
  %v129 = vunpack.c.l.b16 %v59
  %v130 = vunpack.c.l.b16 %v60
  %v131 = vunpack.c.l.b16 %v61
  %v132 = vunpack.c.l.b16 %v62
  %v133 = vunpack.c.l.b16 %v63
  %v134 = vunpack.c.l.b16 %v64
  %v135 = vunpack.c.l.b16 %v65
  %v136 = vunpack.c.l.b16 %v66
  %v137 = vunpack.c.l.b16 %v67
  %v138 = vunpack.c.l.b16 %v68
  %v139 = vunpack.c.l.b16 %v69
  %v140 = vunpack.c.l.b16 %v70
  %v141 = vunpack.c.l.b16 %v71
  %v142 = vunpack.c.l.b16 %v72
  %v143 = vunpack.c.l.b16 %v73
  %v144 = vunpack.c.l.b16 %v74
  %v145 = vunpack.c.l.b16 %v75
  %v146 = vunpack.c.l.b16 %v76
  %v147 = vunpack.c.l.b16 %v77
  %v148 = vunpack.c.l.b16 %v78
  %v149 = vunpack.c.l.b16 %v79
  %v150 = vpack.c.b16 %v119, %v118
  %v151 = vpack.c.b16 %v121, %v120
  %v152 = vpack.c.b16 %v123, %v122
  %v153 = vpack.c.b16 %v125, %v124
  %v154 = vpack.c.b16 %v127, %v126
  %v155 = vpack.c.b16 %v129, %v128
  %v156 = vpack.c.b16 %v131, %v130
  %v157 = vpack.c.b16 %v133, %v132
  %v158 = vpack.c.b16 %v135, %v134
  %v159 = vpack.c.b16 %v137, %v136
  %v160 = vpack.c.b16 %v139, %v138
  %v161 = vpack.c.b16 %v141, %v140
  %v162 = vpack.c.b16 %v143, %v142
  %v163 = vpack.c.b16 %v145, %v144
  %v164 = vpack.c.b16 %v147, %v146
  %v165 = vpack.c.b16 %v149, %v148
  %v168 = vunpack.c.l.b16 %v27
  %v169 = vunpack.c.l.b16 %v28
  %v170 = vpack.c.b16 %v169, %v168
  %vm172 = vcmask 130048
  %v174 = vsel %vm172, %v150, 0
  %v177 = vsel %vm172, %v151, 0
  %v180 = vsel %vm172, %v152, 0
  %v183 = vsel %vm172, %v153, 0
  %v186 = vsel %vm172, %v154, 0
  %v189 = vsel %vm172, %v155, 0
  %v192 = vsel %vm172, %v156, 0
  %v195 = vsel %vm172, %v157, 0
  %v198 = vsel %vm172, %v158, 0
  %v201 = vsel %vm172, %v159, 0
  %v204 = vsel %vm172, %v160, 0
  %v207 = vsel %vm172, %v161, 0
  %v210 = vsel %vm172, %v162, 0
  %v213 = vsel %vm172, %v163, 0
  %v216 = vsel %vm172, %v164, 0
  %v219 = vsel %vm172, %v165, 0
  %221 = vmatprep.subr.bf16.mxu0 0
  %222 = vmatpush1.bf16.msra.mxu0 %v170
  %223 = vmatprep.subr.bf16.mxu0 0
  %224 = vmatpush1.bf16.msra.mxu0 0
  %225 = vmatprep.subr.bf16.mxu0 0
  %226 = vmatpush1.bf16.msra.mxu0 0
  %227 = vmatprep.subr.bf16.mxu0 0
  %228 = vmatpush1.bf16.msra.mxu0 0
  %229 = vmatprep.subr.bf16.mxu0 0
  %230 = vmatpush1.bf16.msra.mxu0 0
  %231 = vmatprep.subr.bf16.mxu0 0
  %232 = vmatpush1.bf16.msra.mxu0 0
  %233 = vmatprep.subr.bf16.mxu0 0
  %234 = vmatpush1.bf16.msra.mxu0 0
  %235 = vmatprep.subr.bf16.mxu0 0
  %236 = vmatpush1.bf16.msra.mxu0 0
  %237 = vmatprep.subr.bf16.mxu0 0
  %238 = vmatpush1.bf16.msra.mxu0 0
  %239 = vmatprep.subr.bf16.mxu0 0
  %240 = vmatpush1.bf16.msra.mxu0 0
  %241 = vmatprep.subr.bf16.mxu0 0
  %242 = vmatpush1.bf16.msra.mxu0 0
  %243 = vmatprep.subr.bf16.mxu0 0
  %244 = vmatpush1.bf16.msra.mxu0 0
  %245 = vmatprep.subr.bf16.mxu0 0
  %246 = vmatpush1.bf16.msra.mxu0 0
  %247 = vmatprep.subr.bf16.mxu0 0
  %248 = vmatpush1.bf16.msra.mxu0 0
  %249 = vmatprep.subr.bf16.mxu0 0
  %250 = vmatpush1.bf16.msra.mxu0 0
  %251 = vmatprep.subr.bf16.mxu0 0
  %252 = vmatpush1.bf16.msra.mxu0 0
  %253 = vmatprep.mubr.bf16.mxu0 0
  %254 = vmatmul.mubr.bf16.gmra.mrb[0].mxu0 %v174
  %v255 = vpop.f32.mrb[0].mxu0
  %v256 = vadd.f32 %v84, %v255
  %v257 = vpop.f32.mrb[0].mxu0
  %v258 = vpop.f32.mrb[0].mxu0
  %v259 = vadd.f32 %v84, %v258
  %v260 = vpop.f32.mrb[0].mxu0
  %261 = vmatprep.mubr.bf16.mxu0 0
  %262 = vmatmul.mubr.bf16.gmra.mrb[0].mxu0 %v177
  %v263 = vpop.f32.mrb[0].mxu0
  %v264 = vadd.f32 %v84, %v263
  %v265 = vpop.f32.mrb[0].mxu0
  %v266 = vpop.f32.mrb[0].mxu0
  %v267 = vadd.f32 %v84, %v266
  %v268 = vpop.f32.mrb[0].mxu0
  %269 = vmatprep.mubr.bf16.mxu0 0
  %270 = vmatmul.mubr.bf16.gmra.mrb[0].mxu0 %v180
  %v271 = vpop.f32.mrb[0].mxu0
  %v272 = vadd.f32 %v84, %v271
  %v273 = vpop.f32.mrb[0].mxu0
  %v274 = vpop.f32.mrb[0].mxu0
  %v275 = vadd.f32 %v84, %v274
  %v276 = vpop.f32.mrb[0].mxu0
  %277 = vmatprep.mubr.bf16.mxu0 0
  %278 = vmatmul.mubr.bf16.gmra.mrb[0].mxu0 %v183
  %v279 = vpop.f32.mrb[0].mxu0
  %v280 = vadd.f32 %v84, %v279
  %v281 = vpop.f32.mrb[0].mxu0
  %v282 = vpop.f32.mrb[0].mxu0
  %v283 = vadd.f32 %v84, %v282
  %v284 = vpop.f32.mrb[0].mxu0
  %285 = vmatprep.mubr.bf16.mxu0 0
  %286 = vmatmul.mubr.bf16.gmra.mrb[0].mxu0 %v186
  %v287 = vpop.f32.mrb[0].mxu0
  %v288 = vadd.f32 %v84, %v287
  %v289 = vpop.f32.mrb[0].mxu0
  %v290 = vpop.f32.mrb[0].mxu0
  %v291 = vadd.f32 %v84, %v290
  %v292 = vpop.f32.mrb[0].mxu0
  %293 = vmatprep.mubr.bf16.mxu0 0
  %294 = vmatmul.mubr.bf16.gmra.mrb[0].mxu0 %v189
  %v295 = vpop.f32.mrb[0].mxu0
  %v296 = vadd.f32 %v84, %v295
  %v297 = vpop.f32.mrb[0].mxu0
  %v298 = vpop.f32.mrb[0].mxu0
  %v299 = vadd.f32 %v84, %v298
  %v300 = vpop.f32.mrb[0].mxu0
  %301 = vmatprep.mubr.bf16.mxu0 0
  %302 = vmatmul.mubr.bf16.gmra.mrb[0].mxu0 %v192
  %v303 = vpop.f32.mrb[0].mxu0
  %v304 = vadd.f32 %v84, %v303
  %v305 = vpop.f32.mrb[0].mxu0
  %v306 = vpop.f32.mrb[0].mxu0
  %v307 = vadd.f32 %v84, %v306
  %v308 = vpop.f32.mrb[0].mxu0
  %309 = vmatprep.mubr.bf16.mxu0 0
  %310 = vmatmul.mubr.bf16.gmra.mrb[0].mxu0 %v195
  %v311 = vpop.f32.mrb[0].mxu0
  %v312 = vadd.f32 %v84, %v311
  %v313 = vpop.f32.mrb[0].mxu0
  %v314 = vpop.f32.mrb[0].mxu0
  %v315 = vadd.f32 %v84, %v314
  %v316 = vpop.f32.mrb[0].mxu0
  %317 = vmatprep.mubr.bf16.mxu0 0
  %318 = vmatmul.mubr.bf16.gmra.mrb[0].mxu0 %v198
  %v319 = vpop.f32.mrb[0].mxu0
  %v320 = vadd.f32 %v84, %v319
  %v321 = vpop.f32.mrb[0].mxu0
  %v322 = vpop.f32.mrb[0].mxu0
  %v323 = vadd.f32 %v84, %v322
  %v324 = vpop.f32.mrb[0].mxu0
  %325 = vmatprep.mubr.bf16.mxu0 0
  %326 = vmatmul.mubr.bf16.gmra.mrb[0].mxu0 %v201
  %v327 = vpop.f32.mrb[0].mxu0
  %v328 = vadd.f32 %v84, %v327
  %v329 = vpop.f32.mrb[0].mxu0
  %v330 = vpop.f32.mrb[0].mxu0
  %v331 = vadd.f32 %v84, %v330
  %v332 = vpop.f32.mrb[0].mxu0
  %333 = vmatprep.mubr.bf16.mxu0 0
  %334 = vmatmul.mubr.bf16.gmra.mrb[0].mxu0 %v204
  %v335 = vpop.f32.mrb[0].mxu0
  %v336 = vadd.f32 %v84, %v335
  %v337 = vpop.f32.mrb[0].mxu0
  %v338 = vpop.f32.mrb[0].mxu0
  %v339 = vadd.f32 %v84, %v338
  %v340 = vpop.f32.mrb[0].mxu0
  %341 = vmatprep.mubr.bf16.mxu0 0
  %342 = vmatmul.mubr.bf16.gmra.mrb[0].mxu0 %v207
  %v343 = vpop.f32.mrb[0].mxu0
  %v344 = vadd.f32 %v84, %v343
  %v345 = vpop.f32.mrb[0].mxu0
  %v346 = vpop.f32.mrb[0].mxu0
  %v347 = vadd.f32 %v84, %v346
  %v348 = vpop.f32.mrb[0].mxu0
  %349 = vmatprep.mubr.bf16.mxu0 0
  %350 = vmatmul.mubr.bf16.gmra.mrb[0].mxu0 %v210
  %v351 = vpop.f32.mrb[0].mxu0
  %v352 = vadd.f32 %v84, %v351
  %v353 = vpop.f32.mrb[0].mxu0
  %v354 = vpop.f32.mrb[0].mxu0
  %v355 = vadd.f32 %v84, %v354
  %v356 = vpop.f32.mrb[0].mxu0
  %357 = vmatprep.mubr.bf16.mxu0 0
  %358 = vmatmul.mubr.bf16.gmra.mrb[0].mxu0 %v213
  %v359 = vpop.f32.mrb[0].mxu0
  %v360 = vadd.f32 %v84, %v359
  %v361 = vpop.f32.mrb[0].mxu0
  %v362 = vpop.f32.mrb[0].mxu0
  %v363 = vadd.f32 %v84, %v362
  %v364 = vpop.f32.mrb[0].mxu0
  %365 = vmatprep.mubr.bf16.mxu0 0
  %366 = vmatmul.mubr.bf16.gmra.mrb[0].mxu0 %v216
  %v367 = vpop.f32.mrb[0].mxu0
  %v368 = vadd.f32 %v84, %v367
  %v369 = vpop.f32.mrb[0].mxu0
  %v370 = vpop.f32.mrb[0].mxu0
  %v371 = vadd.f32 %v84, %v370
  %v372 = vpop.f32.mrb[0].mxu0
  %373 = vmatprep.mubr.bf16.mxu0 0
  %374 = vmatmul.mubr.bf16.gmra.mrb[0].mxu0 %v219
  %v375 = vpop.f32.mrb[0].mxu0
  %v376 = vadd.f32 %v84, %v375
  %v377 = vpop.f32.mrb[0].mxu0
  %v378 = vpop.f32.mrb[0].mxu0
  %v379 = vadd.f32 %v84, %v378
  %v380 = vpop.f32.mrb[0].mxu0
  %381 = vdwg.mxu0
  %vm382 = vcmp.gt.f32.partialorder %v256, 0.0
  %vm383 = vcmp.gt.f32.partialorder %v259, 0.0
  %vm384 = vcmp.gt.f32.partialorder %v264, 0.0
  %vm385 = vcmp.gt.f32.partialorder %v267, 0.0
  %vm386 = vcmp.gt.f32.partialorder %v272, 0.0
  %vm387 = vcmp.gt.f32.partialorder %v275, 0.0
  %vm388 = vcmp.gt.f32.partialorder %v280, 0.0
  %vm389 = vcmp.gt.f32.partialorder %v283, 0.0
  %vm390 = vcmp.gt.f32.partialorder %v288, 0.0
  %vm391 = vcmp.gt.f32.partialorder %v291, 0.0
  %vm392 = vcmp.gt.f32.partialorder %v296, 0.0
  %vm393 = vcmp.gt.f32.partialorder %v299, 0.0
  %vm394 = vcmp.gt.f32.partialorder %v304, 0.0
  %vm395 = vcmp.gt.f32.partialorder %v307, 0.0
  %vm396 = vcmp.gt.f32.partialorder %v312, 0.0
  %vm397 = vcmp.gt.f32.partialorder %v315, 0.0
  %vm398 = vcmp.gt.f32.partialorder %v320, 0.0
  %vm399 = vcmp.gt.f32.partialorder %v323, 0.0
  %vm400 = vcmp.gt.f32.partialorder %v328, 0.0
  %vm401 = vcmp.gt.f32.partialorder %v331, 0.0
  %vm402 = vcmp.gt.f32.partialorder %v336, 0.0
  %vm403 = vcmp.gt.f32.partialorder %v339, 0.0
  %vm404 = vcmp.gt.f32.partialorder %v344, 0.0
  %vm405 = vcmp.gt.f32.partialorder %v347, 0.0
  %vm406 = vcmp.gt.f32.partialorder %v352, 0.0
  %vm407 = vcmp.gt.f32.partialorder %v355, 0.0
  %vm408 = vcmp.gt.f32.partialorder %v360, 0.0
  %vm409 = vcmp.gt.f32.partialorder %v363, 0.0
  %vm410 = vcmp.gt.f32.partialorder %v368, 0.0
  %vm411 = vcmp.gt.f32.partialorder %v371, 0.0
  %vm412 = vcmp.gt.f32.partialorder %v376, 0.0
  %vm413 = vcmp.gt.f32.partialorder %v379, 0.0
  %v414 = vmul.f32 %v256, 0.01
  %v415 = vmul.f32 %v259, 0.01
  %v416 = vmul.f32 %v264, 0.01
  %v417 = vmul.f32 %v267, 0.01
  %v418 = vmul.f32 %v272, 0.01
  %v419 = vmul.f32 %v275, 0.01
  %v420 = vmul.f32 %v280, 0.01
  %v421 = vmul.f32 %v283, 0.01
  %v422 = vmul.f32 %v288, 0.01
  %v423 = vmul.f32 %v291, 0.01
  %v424 = vmul.f32 %v296, 0.01
  %v425 = vmul.f32 %v299, 0.01
  %v426 = vmul.f32 %v304, 0.01
  %v427 = vmul.f32 %v307, 0.01
  %v428 = vmul.f32 %v312, 0.01
  %v429 = vmul.f32 %v315, 0.01
  %v430 = vmul.f32 %v320, 0.01
  %v431 = vmul.f32 %v323, 0.01
  %v432 = vmul.f32 %v328, 0.01
  %v433 = vmul.f32 %v331, 0.01
  %v434 = vmul.f32 %v336, 0.01
  %v435 = vmul.f32 %v339, 0.01
  %v436 = vmul.f32 %v344, 0.01
  %v437 = vmul.f32 %v347, 0.01
  %v438 = vmul.f32 %v352, 0.01
  %v439 = vmul.f32 %v355, 0.01
  %v440 = vmul.f32 %v360, 0.01
  %v441 = vmul.f32 %v363, 0.01
  %v442 = vmul.f32 %v368, 0.01
  %v443 = vmul.f32 %v371, 0.01
  %v444 = vmul.f32 %v376, 0.01
  %v445 = vmul.f32 %v379, 0.01
  %v446 = vsel %vm382, %v256, %v414
  %v447 = vsel %vm383, %v259, %v415
  %v448 = vsel %vm384, %v264, %v416
  %v449 = vsel %vm385, %v267, %v417
  %v450 = vsel %vm386, %v272, %v418
  %v451 = vsel %vm387, %v275, %v419
  %v452 = vsel %vm388, %v280, %v420
  %v453 = vsel %vm389, %v283, %v421
  %v454 = vsel %vm390, %v288, %v422
  %v455 = vsel %vm391, %v291, %v423
  %v456 = vsel %vm392, %v296, %v424
  %v457 = vsel %vm393, %v299, %v425
  %v458 = vsel %vm394, %v304, %v426
  %v459 = vsel %vm395, %v307, %v427
  %v460 = vsel %vm396, %v312, %v428
  %v461 = vsel %vm397, %v315, %v429
  %v462 = vsel %vm398, %v320, %v430
  %v463 = vsel %vm399, %v323, %v431
  %v464 = vsel %vm400, %v328, %v432
  %v465 = vsel %vm401, %v331, %v433
  %v466 = vsel %vm402, %v336, %v434
  %v467 = vsel %vm403, %v339, %v435
  %v468 = vsel %vm404, %v344, %v436
  %v469 = vsel %vm405, %v347, %v437
  %v470 = vsel %vm406, %v352, %v438
  %v471 = vsel %vm407, %v355, %v439
  %v472 = vsel %vm408, %v360, %v440
  %v473 = vsel %vm409, %v363, %v441
  %v474 = vsel %vm410, %v368, %v442
  %v475 = vsel %vm411, %v371, %v443
  %v476 = vsel %vm412, %v376, %v444
  %v477 = vsel %vm413, %v379, %v445
  %v478 = vpack.c.bf16 %v447, %v446
  %v479 = vpack.c.bf16 %v449, %v448
  %v480 = vpack.c.bf16 %v451, %v450
  %v481 = vpack.c.bf16 %v453, %v452
  %v482 = vpack.c.bf16 %v455, %v454
  %v483 = vpack.c.bf16 %v457, %v456
  %v484 = vpack.c.bf16 %v459, %v458
  %v485 = vpack.c.bf16 %v461, %v460
  %v486 = vpack.c.bf16 %v463, %v462
  %v487 = vpack.c.bf16 %v465, %v464
  %v488 = vpack.c.bf16 %v467, %v466
  %v489 = vpack.c.bf16 %v469, %v468
  %v490 = vpack.c.bf16 %v471, %v470
  %v491 = vpack.c.bf16 %v473, %v472
  %v492 = vpack.c.bf16 %v475, %v474
  %v493 = vpack.c.bf16 %v477, %v476
  %v495 = vlaneseq
  %v496 = vshrl.u32 %v495, 7
  %v497 = vsub.s32 0, %v496
  %v498 = vrot.slane %v46, %v497
  %v508 = vunpack.c.l.b16 %v29
  %v509 = vunpack.c.l.b16 %v30
  %v510 = vunpack.c.l.b16 %v31
  %v511 = vunpack.c.l.b16 %v32
  %v512 = vunpack.c.l.b16 %v33
  %v513 = vunpack.c.l.b16 %v34
  %v514 = vunpack.c.l.b16 %v35
  %v515 = vunpack.c.l.b16 %v36
  %v516 = vpack.c.b16 %v509, %v508
  %v517 = vpack.c.b16 %v511, %v510
  %v518 = vpack.c.b16 %v513, %v512
  %v519 = vpack.c.b16 %v515, %v514
  %vm524 = vcmask 523264
  %v526 = vsel %vm524, %v478, 0
  %v529 = vsel %vm524, %v479, 0
  %v532 = vsel %vm524, %v480, 0
  %v535 = vsel %vm524, %v481, 0
  %v538 = vsel %vm524, %v482, 0
  %v541 = vsel %vm524, %v483, 0
  %v544 = vsel %vm524, %v484, 0
  %v547 = vsel %vm524, %v485, 0
  %v550 = vsel %vm524, %v486, 0
  %v553 = vsel %vm524, %v487, 0
  %v556 = vsel %vm524, %v488, 0
  %v559 = vsel %vm524, %v489, 0
  %v562 = vsel %vm524, %v490, 0
  %v565 = vsel %vm524, %v491, 0
  %v568 = vsel %vm524, %v492, 0
  %v571 = vsel %vm524, %v493, 0
  %573 = vmatprep.subr.bf16.mxu0 0
  %574 = vmatpush1.bf16.msra.mxu0 %v516
  %575 = vmatprep.subr.bf16.mxu0 0
  %576 = vmatpush1.bf16.msra.mxu0 %v517
  %577 = vmatprep.subr.bf16.mxu0 0
  %578 = vmatpush1.bf16.msra.mxu0 %v518
  %579 = vmatprep.subr.bf16.mxu0 0
  %580 = vmatpush1.bf16.msra.mxu0 %v519
  %581 = vmatprep.subr.bf16.mxu0 0
  %582 = vmatpush1.bf16.msra.mxu0 0
  %583 = vmatprep.subr.bf16.mxu0 0
  %584 = vmatpush1.bf16.msra.mxu0 0
  %585 = vmatprep.subr.bf16.mxu0 0
  %586 = vmatpush1.bf16.msra.mxu0 0
  %587 = vmatprep.subr.bf16.mxu0 0
  %588 = vmatpush1.bf16.msra.mxu0 0
  %589 = vmatprep.subr.bf16.mxu0 0
  %590 = vmatpush1.bf16.msra.mxu0 0
  %591 = vmatprep.subr.bf16.mxu0 0
  %592 = vmatpush1.bf16.msra.mxu0 0
  %593 = vmatprep.subr.bf16.mxu0 0
  %594 = vmatpush1.bf16.msra.mxu0 0
  %595 = vmatprep.subr.bf16.mxu0 0
  %596 = vmatpush1.bf16.msra.mxu0 0
  %597 = vmatprep.subr.bf16.mxu0 0
  %598 = vmatpush1.bf16.msra.mxu0 0
  %599 = vmatprep.subr.bf16.mxu0 0
  %600 = vmatpush1.bf16.msra.mxu0 0
  %601 = vmatprep.subr.bf16.mxu0 0
  %602 = vmatpush1.bf16.msra.mxu0 0
  %603 = vmatprep.subr.bf16.mxu0 0
  %604 = vmatpush1.bf16.msra.mxu0 0
  %605 = vmatprep.mubr.bf16.mxu0 0
  %606 = vmatmul.mubr.bf16.gmra.mrb[0].mxu0 %v526
  %v607 = vpop.f32.mrb[0].mxu0
  %v608 = vadd.f32 %v498, %v607
  %v609 = vpop.f32.mrb[0].mxu0
  %v610 = vpop.f32.mrb[0].mxu0
  %v611 = vadd.f32 %v498, %v610
  %v612 = vpop.f32.mrb[0].mxu0
  %613 = vmatprep.mubr.bf16.mxu0 0
  %614 = vmatmul.mubr.bf16.gmra.mrb[0].mxu0 %v529
  %v615 = vpop.f32.mrb[0].mxu0
  %v616 = vadd.f32 %v498, %v615
  %v617 = vpop.f32.mrb[0].mxu0
  %v618 = vpop.f32.mrb[0].mxu0
  %v619 = vadd.f32 %v498, %v618
  %v620 = vpop.f32.mrb[0].mxu0
  %621 = vmatprep.mubr.bf16.mxu0 0
  %622 = vmatmul.mubr.bf16.gmra.mrb[0].mxu0 %v532
  %v623 = vpop.f32.mrb[0].mxu0
  %v624 = vadd.f32 %v498, %v623
  %v625 = vpop.f32.mrb[0].mxu0
  %v626 = vpop.f32.mrb[0].mxu0
  %v627 = vadd.f32 %v498, %v626
  %v628 = vpop.f32.mrb[0].mxu0
  %629 = vmatprep.mubr.bf16.mxu0 0
  %630 = vmatmul.mubr.bf16.gmra.mrb[0].mxu0 %v535
  %v631 = vpop.f32.mrb[0].mxu0
  %v632 = vadd.f32 %v498, %v631
  %v633 = vpop.f32.mrb[0].mxu0
  %v634 = vpop.f32.mrb[0].mxu0
  %v635 = vadd.f32 %v498, %v634
  %v636 = vpop.f32.mrb[0].mxu0
  %637 = vmatprep.mubr.bf16.mxu0 0
  %638 = vmatmul.mubr.bf16.gmra.mrb[0].mxu0 %v538
  %v639 = vpop.f32.mrb[0].mxu0
  %v640 = vadd.f32 %v498, %v639
  %v641 = vpop.f32.mrb[0].mxu0
  %v642 = vpop.f32.mrb[0].mxu0
  %v643 = vadd.f32 %v498, %v642
  %v644 = vpop.f32.mrb[0].mxu0
  %645 = vmatprep.mubr.bf16.mxu0 0
  %646 = vmatmul.mubr.bf16.gmra.mrb[0].mxu0 %v541
  %v647 = vpop.f32.mrb[0].mxu0
  %v648 = vadd.f32 %v498, %v647
  %v649 = vpop.f32.mrb[0].mxu0
  %v650 = vpop.f32.mrb[0].mxu0
  %v651 = vadd.f32 %v498, %v650
  %v652 = vpop.f32.mrb[0].mxu0
  %653 = vmatprep.mubr.bf16.mxu0 0
  %654 = vmatmul.mubr.bf16.gmra.mrb[0].mxu0 %v544
  %v655 = vpop.f32.mrb[0].mxu0
  %v656 = vadd.f32 %v498, %v655
  %v657 = vpop.f32.mrb[0].mxu0
  %v658 = vpop.f32.mrb[0].mxu0
  %v659 = vadd.f32 %v498, %v658
  %v660 = vpop.f32.mrb[0].mxu0
  %661 = vmatprep.mubr.bf16.mxu0 0
  %662 = vmatmul.mubr.bf16.gmra.mrb[0].mxu0 %v547
  %v663 = vpop.f32.mrb[0].mxu0
  %v664 = vadd.f32 %v498, %v663
  %v665 = vpop.f32.mrb[0].mxu0
  %v666 = vpop.f32.mrb[0].mxu0
  %v667 = vadd.f32 %v498, %v666
  %v668 = vpop.f32.mrb[0].mxu0
  %669 = vmatprep.mubr.bf16.mxu0 0
  %670 = vmatmul.mubr.bf16.gmra.mrb[0].mxu0 %v550
  %v671 = vpop.f32.mrb[0].mxu0
  %v672 = vadd.f32 %v498, %v671
  %v673 = vpop.f32.mrb[0].mxu0
  %v674 = vpop.f32.mrb[0].mxu0
  %v675 = vadd.f32 %v498, %v674
  %v676 = vpop.f32.mrb[0].mxu0
  %677 = vmatprep.mubr.bf16.mxu0 0
  %678 = vmatmul.mubr.bf16.gmra.mrb[0].mxu0 %v553
  %v679 = vpop.f32.mrb[0].mxu0
  %v680 = vadd.f32 %v498, %v679
  %v681 = vpop.f32.mrb[0].mxu0
  %v682 = vpop.f32.mrb[0].mxu0
  %v683 = vadd.f32 %v498, %v682
  %v684 = vpop.f32.mrb[0].mxu0
  %685 = vmatprep.mubr.bf16.mxu0 0
  %686 = vmatmul.mubr.bf16.gmra.mrb[0].mxu0 %v556
  %v687 = vpop.f32.mrb[0].mxu0
  %v688 = vadd.f32 %v498, %v687
  %v689 = vpop.f32.mrb[0].mxu0
  %v690 = vpop.f32.mrb[0].mxu0
  %v691 = vadd.f32 %v498, %v690
  %v692 = vpop.f32.mrb[0].mxu0
  %693 = vmatprep.mubr.bf16.mxu0 0
  %694 = vmatmul.mubr.bf16.gmra.mrb[0].mxu0 %v559
  %v695 = vpop.f32.mrb[0].mxu0
  %v696 = vadd.f32 %v498, %v695
  %v697 = vpop.f32.mrb[0].mxu0
  %v698 = vpop.f32.mrb[0].mxu0
  %v699 = vadd.f32 %v498, %v698
  %v700 = vpop.f32.mrb[0].mxu0
  %701 = vmatprep.mubr.bf16.mxu0 0
  %702 = vmatmul.mubr.bf16.gmra.mrb[0].mxu0 %v562
  %v703 = vpop.f32.mrb[0].mxu0
  %v704 = vadd.f32 %v498, %v703
  %v705 = vpop.f32.mrb[0].mxu0
  %v706 = vpop.f32.mrb[0].mxu0
  %v707 = vadd.f32 %v498, %v706
  %v708 = vpop.f32.mrb[0].mxu0
  %709 = vmatprep.mubr.bf16.mxu0 0
  %710 = vmatmul.mubr.bf16.gmra.mrb[0].mxu0 %v565
  %v711 = vpop.f32.mrb[0].mxu0
  %v712 = vadd.f32 %v498, %v711
  %v713 = vpop.f32.mrb[0].mxu0
  %v714 = vpop.f32.mrb[0].mxu0
  %v715 = vadd.f32 %v498, %v714
  %v716 = vpop.f32.mrb[0].mxu0
  %717 = vmatprep.mubr.bf16.mxu0 0
  %718 = vmatmul.mubr.bf16.gmra.mrb[0].mxu0 %v568
  %v719 = vpop.f32.mrb[0].mxu0
  %v720 = vadd.f32 %v498, %v719
  %v721 = vpop.f32.mrb[0].mxu0
  %v722 = vpop.f32.mrb[0].mxu0
  %v723 = vadd.f32 %v498, %v722
  %v724 = vpop.f32.mrb[0].mxu0
  %725 = vmatprep.mubr.bf16.mxu0 0
  %726 = vmatmul.mubr.bf16.gmra.mrb[0].mxu0 %v571
  %v727 = vpop.f32.mrb[0].mxu0
  %v728 = vadd.f32 %v498, %v727
  %v729 = vpop.f32.mrb[0].mxu0
  %v730 = vpop.f32.mrb[0].mxu0
  %v731 = vadd.f32 %v498, %v730
  %v732 = vpop.f32.mrb[0].mxu0
  %733 = vdwg.mxu0
  %vm734 = vcmp.gt.f32.partialorder %v608, 0.0
  %vm735 = vcmp.gt.f32.partialorder %v611, 0.0
  %vm736 = vcmp.gt.f32.partialorder %v616, 0.0
  %vm737 = vcmp.gt.f32.partialorder %v619, 0.0
  %vm738 = vcmp.gt.f32.partialorder %v624, 0.0
  %vm739 = vcmp.gt.f32.partialorder %v627, 0.0
  %vm740 = vcmp.gt.f32.partialorder %v632, 0.0
  %vm741 = vcmp.gt.f32.partialorder %v635, 0.0
  %vm742 = vcmp.gt.f32.partialorder %v640, 0.0
  %vm743 = vcmp.gt.f32.partialorder %v643, 0.0
  %vm744 = vcmp.gt.f32.partialorder %v648, 0.0
  %vm745 = vcmp.gt.f32.partialorder %v651, 0.0
  %vm746 = vcmp.gt.f32.partialorder %v656, 0.0
  %vm747 = vcmp.gt.f32.partialorder %v659, 0.0
  %vm748 = vcmp.gt.f32.partialorder %v664, 0.0
  %vm749 = vcmp.gt.f32.partialorder %v667, 0.0
  %vm750 = vcmp.gt.f32.partialorder %v672, 0.0
  %vm751 = vcmp.gt.f32.partialorder %v675, 0.0
  %vm752 = vcmp.gt.f32.partialorder %v680, 0.0
  %vm753 = vcmp.gt.f32.partialorder %v683, 0.0
  %vm754 = vcmp.gt.f32.partialorder %v688, 0.0
  %vm755 = vcmp.gt.f32.partialorder %v691, 0.0
  %vm756 = vcmp.gt.f32.partialorder %v696, 0.0
  %vm757 = vcmp.gt.f32.partialorder %v699, 0.0
  %vm758 = vcmp.gt.f32.partialorder %v704, 0.0
  %vm759 = vcmp.gt.f32.partialorder %v707, 0.0
  %vm760 = vcmp.gt.f32.partialorder %v712, 0.0
  %vm761 = vcmp.gt.f32.partialorder %v715, 0.0
  %vm762 = vcmp.gt.f32.partialorder %v720, 0.0
  %vm763 = vcmp.gt.f32.partialorder %v723, 0.0
  %vm764 = vcmp.gt.f32.partialorder %v728, 0.0
  %vm765 = vcmp.gt.f32.partialorder %v731, 0.0
  %v766 = vmul.f32 %v608, 0.01
  %v767 = vmul.f32 %v611, 0.01
  %v768 = vmul.f32 %v616, 0.01
  %v769 = vmul.f32 %v619, 0.01
  %v770 = vmul.f32 %v624, 0.01
  %v771 = vmul.f32 %v627, 0.01
  %v772 = vmul.f32 %v632, 0.01
  %v773 = vmul.f32 %v635, 0.01
  %v774 = vmul.f32 %v640, 0.01
  %v775 = vmul.f32 %v643, 0.01
  %v776 = vmul.f32 %v648, 0.01
  %v777 = vmul.f32 %v651, 0.01
  %v778 = vmul.f32 %v656, 0.01
  %v779 = vmul.f32 %v659, 0.01
  %v780 = vmul.f32 %v664, 0.01
  %v781 = vmul.f32 %v667, 0.01
  %v782 = vmul.f32 %v672, 0.01
  %v783 = vmul.f32 %v675, 0.01
  %v784 = vmul.f32 %v680, 0.01
  %v785 = vmul.f32 %v683, 0.01
  %v786 = vmul.f32 %v688, 0.01
  %v787 = vmul.f32 %v691, 0.01
  %v788 = vmul.f32 %v696, 0.01
  %v789 = vmul.f32 %v699, 0.01
  %v790 = vmul.f32 %v704, 0.01
  %v791 = vmul.f32 %v707, 0.01
  %v792 = vmul.f32 %v712, 0.01
  %v793 = vmul.f32 %v715, 0.01
  %v794 = vmul.f32 %v720, 0.01
  %v795 = vmul.f32 %v723, 0.01
  %v796 = vmul.f32 %v728, 0.01
  %v797 = vmul.f32 %v731, 0.01
  %v798 = vsel %vm734, %v608, %v766
  %v799 = vsel %vm735, %v611, %v767
  %v800 = vsel %vm736, %v616, %v768
  %v801 = vsel %vm737, %v619, %v769
  %v802 = vsel %vm738, %v624, %v770
  %v803 = vsel %vm739, %v627, %v771
  %v804 = vsel %vm740, %v632, %v772
  %v805 = vsel %vm741, %v635, %v773
  %v806 = vsel %vm742, %v640, %v774
  %v807 = vsel %vm743, %v643, %v775
  %v808 = vsel %vm744, %v648, %v776
  %v809 = vsel %vm745, %v651, %v777
  %v810 = vsel %vm746, %v656, %v778
  %v811 = vsel %vm747, %v659, %v779
  %v812 = vsel %vm748, %v664, %v780
  %v813 = vsel %vm749, %v667, %v781
  %v814 = vsel %vm750, %v672, %v782
  %v815 = vsel %vm751, %v675, %v783
  %v816 = vsel %vm752, %v680, %v784
  %v817 = vsel %vm753, %v683, %v785
  %v818 = vsel %vm754, %v688, %v786
  %v819 = vsel %vm755, %v691, %v787
  %v820 = vsel %vm756, %v696, %v788
  %v821 = vsel %vm757, %v699, %v789
  %v822 = vsel %vm758, %v704, %v790
  %v823 = vsel %vm759, %v707, %v791
  %v824 = vsel %vm760, %v712, %v792
  %v825 = vsel %vm761, %v715, %v793
  %v826 = vsel %vm762, %v720, %v794
  %v827 = vsel %vm763, %v723, %v795
  %v828 = vsel %vm764, %v728, %v796
  %v829 = vsel %vm765, %v731, %v797
  %v830 = vpack.c.bf16 %v799, %v798
  %v831 = vpack.c.bf16 %v801, %v800
  %v832 = vpack.c.bf16 %v803, %v802
  %v833 = vpack.c.bf16 %v805, %v804
  %v834 = vpack.c.bf16 %v807, %v806
  %v835 = vpack.c.bf16 %v809, %v808
  %v836 = vpack.c.bf16 %v811, %v810
  %v837 = vpack.c.bf16 %v813, %v812
  %v838 = vpack.c.bf16 %v815, %v814
  %v839 = vpack.c.bf16 %v817, %v816
  %v840 = vpack.c.bf16 %v819, %v818
  %v841 = vpack.c.bf16 %v821, %v820
  %v842 = vpack.c.bf16 %v823, %v822
  %v843 = vpack.c.bf16 %v825, %v824
  %v844 = vpack.c.bf16 %v827, %v826
  %v845 = vpack.c.bf16 %v829, %v828
  %v847 = vlaneseq
  %v848 = vshrl.u32 %v847, 7
  %v849 = vsub.s32 0, %v848
  %v850 = vrot.slane %v47, %v849
  %v860 = vunpack.c.l.b16 %v37
  %v861 = vunpack.c.l.b16 %v38
  %v862 = vunpack.c.l.b16 %v39
  %v863 = vunpack.c.l.b16 %v40
  %v864 = vunpack.c.l.b16 %v41
  %v865 = vunpack.c.l.b16 %v42
  %v866 = vunpack.c.l.b16 %v43
  %v867 = vunpack.c.l.b16 %v44
  %v868 = vpack.c.b16 %v861, %v860
  %v869 = vpack.c.b16 %v863, %v862
  %v870 = vpack.c.b16 %v865, %v864
  %v871 = vpack.c.b16 %v867, %v866
  %v877 = vsel %vm524, %v830, 0
  %v880 = vsel %vm524, %v831, 0
  %v883 = vsel %vm524, %v832, 0
  %v886 = vsel %vm524, %v833, 0
  %v889 = vsel %vm524, %v834, 0
  %v892 = vsel %vm524, %v835, 0
  %v895 = vsel %vm524, %v836, 0
  %v898 = vsel %vm524, %v837, 0
  %v901 = vsel %vm524, %v838, 0
  %v904 = vsel %vm524, %v839, 0
  %v907 = vsel %vm524, %v840, 0
  %v910 = vsel %vm524, %v841, 0
  %v913 = vsel %vm524, %v842, 0
  %v916 = vsel %vm524, %v843, 0
  %v919 = vsel %vm524, %v844, 0
  %v922 = vsel %vm524, %v845, 0
  %924 = vmatprep.subr.bf16.mxu0 0
  %925 = vmatpush1.bf16.msra.mxu0 %v868
  %926 = vmatprep.subr.bf16.mxu0 0
  %927 = vmatpush1.bf16.msra.mxu0 %v869
  %928 = vmatprep.subr.bf16.mxu0 0
  %929 = vmatpush1.bf16.msra.mxu0 %v870
  %930 = vmatprep.subr.bf16.mxu0 0
  %931 = vmatpush1.bf16.msra.mxu0 %v871
  %932 = vmatprep.subr.bf16.mxu0 0
  %933 = vmatpush1.bf16.msra.mxu0 0
  %934 = vmatprep.subr.bf16.mxu0 0
  %935 = vmatpush1.bf16.msra.mxu0 0
  %936 = vmatprep.subr.bf16.mxu0 0
  %937 = vmatpush1.bf16.msra.mxu0 0
  %938 = vmatprep.subr.bf16.mxu0 0
  %939 = vmatpush1.bf16.msra.mxu0 0
  %940 = vmatprep.subr.bf16.mxu0 0
  %941 = vmatpush1.bf16.msra.mxu0 0
  %942 = vmatprep.subr.bf16.mxu0 0
  %943 = vmatpush1.bf16.msra.mxu0 0
  %944 = vmatprep.subr.bf16.mxu0 0
  %945 = vmatpush1.bf16.msra.mxu0 0
  %946 = vmatprep.subr.bf16.mxu0 0
  %947 = vmatpush1.bf16.msra.mxu0 0
  %948 = vmatprep.subr.bf16.mxu0 0
  %949 = vmatpush1.bf16.msra.mxu0 0
  %950 = vmatprep.subr.bf16.mxu0 0
  %951 = vmatpush1.bf16.msra.mxu0 0
  %952 = vmatprep.subr.bf16.mxu0 0
  %953 = vmatpush1.bf16.msra.mxu0 0
  %954 = vmatprep.subr.bf16.mxu0 0
  %955 = vmatpush1.bf16.msra.mxu0 0
  %956 = vmatprep.mubr.bf16.mxu0 0
  %957 = vmatmul.mubr.bf16.gmra.mrb[0].mxu0 %v877
  %v958 = vpop.f32.mrb[0].mxu0
  %v959 = vadd.f32 %v850, %v958
  %v960 = vpop.f32.mrb[0].mxu0
  %v961 = vpop.f32.mrb[0].mxu0
  %v962 = vadd.f32 %v850, %v961
  %v963 = vpop.f32.mrb[0].mxu0
  %964 = vmatprep.mubr.bf16.mxu0 0
  %965 = vmatmul.mubr.bf16.gmra.mrb[0].mxu0 %v880
  %v966 = vpop.f32.mrb[0].mxu0
  %v967 = vadd.f32 %v850, %v966
  %v968 = vpop.f32.mrb[0].mxu0
  %v969 = vpop.f32.mrb[0].mxu0
  %v970 = vadd.f32 %v850, %v969
  %v971 = vpop.f32.mrb[0].mxu0
  %972 = vmatprep.mubr.bf16.mxu0 0
  %973 = vmatmul.mubr.bf16.gmra.mrb[0].mxu0 %v883
  %v974 = vpop.f32.mrb[0].mxu0
  %v975 = vadd.f32 %v850, %v974
  %v976 = vpop.f32.mrb[0].mxu0
  %v977 = vpop.f32.mrb[0].mxu0
  %v978 = vadd.f32 %v850, %v977
  %v979 = vpop.f32.mrb[0].mxu0
  %980 = vmatprep.mubr.bf16.mxu0 0
  %981 = vmatmul.mubr.bf16.gmra.mrb[0].mxu0 %v886
  %v982 = vpop.f32.mrb[0].mxu0
  %v983 = vadd.f32 %v850, %v982
  %v984 = vpop.f32.mrb[0].mxu0
  %v985 = vpop.f32.mrb[0].mxu0
  %v986 = vadd.f32 %v850, %v985
  %v987 = vpop.f32.mrb[0].mxu0
  %988 = vmatprep.mubr.bf16.mxu0 0
  %989 = vmatmul.mubr.bf16.gmra.mrb[0].mxu0 %v889
  %v990 = vpop.f32.mrb[0].mxu0
  %v991 = vadd.f32 %v850, %v990
  %v992 = vpop.f32.mrb[0].mxu0
  %v993 = vpop.f32.mrb[0].mxu0
  %v994 = vadd.f32 %v850, %v993
  %v995 = vpop.f32.mrb[0].mxu0
  %996 = vmatprep.mubr.bf16.mxu0 0
  %997 = vmatmul.mubr.bf16.gmra.mrb[0].mxu0 %v892
  %v998 = vpop.f32.mrb[0].mxu0
  %v999 = vadd.f32 %v850, %v998
  %v1000 = vpop.f32.mrb[0].mxu0
  %v1001 = vpop.f32.mrb[0].mxu0
  %v1002 = vadd.f32 %v850, %v1001
  %v1003 = vpop.f32.mrb[0].mxu0
  %1004 = vmatprep.mubr.bf16.mxu0 0
  %1005 = vmatmul.mubr.bf16.gmra.mrb[0].mxu0 %v895
  %v1006 = vpop.f32.mrb[0].mxu0
  %v1007 = vadd.f32 %v850, %v1006
  %v1008 = vpop.f32.mrb[0].mxu0
  %v1009 = vpop.f32.mrb[0].mxu0
  %v1010 = vadd.f32 %v850, %v1009
  %v1011 = vpop.f32.mrb[0].mxu0
  %1012 = vmatprep.mubr.bf16.mxu0 0
  %1013 = vmatmul.mubr.bf16.gmra.mrb[0].mxu0 %v898
  %v1014 = vpop.f32.mrb[0].mxu0
  %v1015 = vadd.f32 %v850, %v1014
  %v1016 = vpop.f32.mrb[0].mxu0
  %v1017 = vpop.f32.mrb[0].mxu0
  %v1018 = vadd.f32 %v850, %v1017
  %v1019 = vpop.f32.mrb[0].mxu0
  %1020 = vmatprep.mubr.bf16.mxu0 0
  %1021 = vmatmul.mubr.bf16.gmra.mrb[0].mxu0 %v901
  %v1022 = vpop.f32.mrb[0].mxu0
  %v1023 = vadd.f32 %v850, %v1022
  %v1024 = vpop.f32.mrb[0].mxu0
  %v1025 = vpop.f32.mrb[0].mxu0
  %v1026 = vadd.f32 %v850, %v1025
  %v1027 = vpop.f32.mrb[0].mxu0
  %1028 = vmatprep.mubr.bf16.mxu0 0
  %1029 = vmatmul.mubr.bf16.gmra.mrb[0].mxu0 %v904
  %v1030 = vpop.f32.mrb[0].mxu0
  %v1031 = vadd.f32 %v850, %v1030
  %v1032 = vpop.f32.mrb[0].mxu0
  %v1033 = vpop.f32.mrb[0].mxu0
  %v1034 = vadd.f32 %v850, %v1033
  %v1035 = vpop.f32.mrb[0].mxu0
  %1036 = vmatprep.mubr.bf16.mxu0 0
  %1037 = vmatmul.mubr.bf16.gmra.mrb[0].mxu0 %v907
  %v1038 = vpop.f32.mrb[0].mxu0
  %v1039 = vadd.f32 %v850, %v1038
  %v1040 = vpop.f32.mrb[0].mxu0
  %v1041 = vpop.f32.mrb[0].mxu0
  %v1042 = vadd.f32 %v850, %v1041
  %v1043 = vpop.f32.mrb[0].mxu0
  %1044 = vmatprep.mubr.bf16.mxu0 0
  %1045 = vmatmul.mubr.bf16.gmra.mrb[0].mxu0 %v910
  %v1046 = vpop.f32.mrb[0].mxu0
  %v1047 = vadd.f32 %v850, %v1046
  %v1048 = vpop.f32.mrb[0].mxu0
  %v1049 = vpop.f32.mrb[0].mxu0
  %v1050 = vadd.f32 %v850, %v1049
  %v1051 = vpop.f32.mrb[0].mxu0
  %1052 = vmatprep.mubr.bf16.mxu0 0
  %1053 = vmatmul.mubr.bf16.gmra.mrb[0].mxu0 %v913
  %v1054 = vpop.f32.mrb[0].mxu0
  %v1055 = vadd.f32 %v850, %v1054
  %v1056 = vpop.f32.mrb[0].mxu0
  %v1057 = vpop.f32.mrb[0].mxu0
  %v1058 = vadd.f32 %v850, %v1057
  %v1059 = vpop.f32.mrb[0].mxu0
  %1060 = vmatprep.mubr.bf16.mxu0 0
  %1061 = vmatmul.mubr.bf16.gmra.mrb[0].mxu0 %v916
  %v1062 = vpop.f32.mrb[0].mxu0
  %v1063 = vadd.f32 %v850, %v1062
  %v1064 = vpop.f32.mrb[0].mxu0
  %v1065 = vpop.f32.mrb[0].mxu0
  %v1066 = vadd.f32 %v850, %v1065
  %v1067 = vpop.f32.mrb[0].mxu0
  %1068 = vmatprep.mubr.bf16.mxu0 0
  %1069 = vmatmul.mubr.bf16.gmra.mrb[0].mxu0 %v919
  %v1070 = vpop.f32.mrb[0].mxu0
  %v1071 = vadd.f32 %v850, %v1070
  %v1072 = vpop.f32.mrb[0].mxu0
  %v1073 = vpop.f32.mrb[0].mxu0
  %v1074 = vadd.f32 %v850, %v1073
  %v1075 = vpop.f32.mrb[0].mxu0
  %1076 = vmatprep.mubr.bf16.mxu0 0
  %1077 = vmatmul.mubr.bf16.gmra.mrb[0].mxu0 %v922
  %v1078 = vpop.f32.mrb[0].mxu0
  %v1079 = vadd.f32 %v850, %v1078
  %v1080 = vpop.f32.mrb[0].mxu0
  %v1081 = vpop.f32.mrb[0].mxu0
  %v1082 = vadd.f32 %v850, %v1081
  %v1083 = vpop.f32.mrb[0].mxu0
  %1084 = vdwg.mxu0
  %v1085 = vtanh.pop %v959
  %v1086 = vtanh.pop %v962
  %v1087 = vtanh.pop %v967
  %v1088 = vtanh.pop %v970
  %v1089 = vtanh.pop %v975
  %v1090 = vtanh.pop %v978
  %v1091 = vtanh.pop %v983
  %v1092 = vtanh.pop %v986
  %v1093 = vtanh.pop %v991
  %v1094 = vtanh.pop %v994
  %v1095 = vtanh.pop %v999
  %v1096 = vtanh.pop %v1002
  %v1097 = vtanh.pop %v1007
  %v1098 = vtanh.pop %v1010
  %v1099 = vtanh.pop %v1015
  %v1100 = vtanh.pop %v1018
  %v1101 = vtanh.pop %v1023
  %v1102 = vtanh.pop %v1026
  %v1103 = vtanh.pop %v1031
  %v1104 = vtanh.pop %v1034
  %v1105 = vtanh.pop %v1039
  %v1106 = vtanh.pop %v1042
  %v1107 = vtanh.pop %v1047
  %v1108 = vtanh.pop %v1050
  %v1109 = vtanh.pop %v1055
  %v1110 = vtanh.pop %v1058
  %v1111 = vtanh.pop %v1063
  %v1112 = vtanh.pop %v1066
  %v1113 = vtanh.pop %v1071
  %v1114 = vtanh.pop %v1074
  %v1115 = vtanh.pop %v1079
  %v1116 = vtanh.pop %v1082
  %vm1117 = vcmask 31744
  %1118 = vst.msk [vmem:[%s7] sm:$0xff] %vm1117, %v1085
  %1119 = vst.msk [vmem:[%s7 + $0x8] sm:$0xff] %vm1117, %v1086
  %1120 = vst.msk [vmem:[%s7 + $0x10] sm:$0xff] %vm1117, %v1087
  %1121 = vst.msk [vmem:[%s7 + $0x18] sm:$0xff] %vm1117, %v1088
  %1122 = vst.msk [vmem:[%s7 + $0x20] sm:$0xff] %vm1117, %v1089
  %1123 = vst.msk [vmem:[%s7 + $0x28] sm:$0xff] %vm1117, %v1090
  %1124 = vst.msk [vmem:[%s7 + $0x30] sm:$0xff] %vm1117, %v1091
  %1125 = vst.msk [vmem:[%s7 + $0x38] sm:$0xff] %vm1117, %v1092
  %1126 = vst.msk [vmem:[%s7 + $0x40] sm:$0xff] %vm1117, %v1093
  %1127 = vst.msk [vmem:[%s7 + $0x48] sm:$0xff] %vm1117, %v1094
  %1128 = vst.msk [vmem:[%s7 + $0x50] sm:$0xff] %vm1117, %v1095
  %1129 = vst.msk [vmem:[%s7 + $0x58] sm:$0xff] %vm1117, %v1096
  %1130 = vst.msk [vmem:[%s7 + $0x60] sm:$0xff] %vm1117, %v1097
  %1131 = vst.msk [vmem:[%s7 + $0x68] sm:$0xff] %vm1117, %v1098
  %1132 = vst.msk [vmem:[%s7 + $0x70] sm:$0xff] %vm1117, %v1099
  %1133 = vst.msk [vmem:[%s7 + $0x78] sm:$0xff] %vm1117, %v1100
  %1134 = vst.msk [vmem:[%s7 + $0x80] sm:$0xff] %vm1117, %v1101
  %1135 = vst.msk [vmem:[%s7 + $0x88] sm:$0xff] %vm1117, %v1102
  %1136 = vst.msk [vmem:[%s7 + $0x90] sm:$0xff] %vm1117, %v1103
  %1137 = vst.msk [vmem:[%s7 + $0x98] sm:$0xff] %vm1117, %v1104
  %1138 = vst.msk [vmem:[%s7 + $0xa0] sm:$0xff] %vm1117, %v1105
  %1139 = vst.msk [vmem:[%s7 + $0xa8] sm:$0xff] %vm1117, %v1106
  %1140 = vst.msk [vmem:[%s7 + $0xb0] sm:$0xff] %vm1117, %v1107
  %1141 = vst.msk [vmem:[%s7 + $0xb8] sm:$0xff] %vm1117, %v1108
  %1142 = vst.msk [vmem:[%s7 + $0xc0] sm:$0xff] %vm1117, %v1109
  %1143 = vst.msk [vmem:[%s7 + $0xc8] sm:$0xff] %vm1117, %v1110
  %1144 = vst.msk [vmem:[%s7 + $0xd0] sm:$0xff] %vm1117, %v1111
  %1145 = vst.msk [vmem:[%s7 + $0xd8] sm:$0xff] %vm1117, %v1112
  %1146 = vst.msk [vmem:[%s7 + $0xe0] sm:$0xff] %vm1117, %v1113
  %1147 = vst.msk [vmem:[%s7 + $0xe8] sm:$0xff] %vm1117, %v1114
  %1148 = vst.msk [vmem:[%s7 + $0xf0] sm:$0xff] %vm1117, %v1115
  %1149 = vst.msk [vmem:[%s7 + $0xf8] sm:$0xff] %vm1117, %v1116
  %v1150 = vld [vmem:[%s0 + $0x80] sm:$0xf]
  %v1151 = vld [vmem:[%s0 + $0x84] sm:$0xf]
  %v1152 = vld [vmem:[%s0 + $0x88] sm:$0xf]
  %v1153 = vld [vmem:[%s0 + $0x8c] sm:$0xf]
  %v1154 = vld [vmem:[%s0 + $0x90] sm:$0xf]
  %v1155 = vld [vmem:[%s0 + $0x94] sm:$0xf]
  %v1156 = vld [vmem:[%s0 + $0x98] sm:$0xf]
  %v1157 = vld [vmem:[%s0 + $0x9c] sm:$0xf]
  %v1158 = vld [vmem:[%s0 + $0xa0] sm:$0xf]
  %v1159 = vld [vmem:[%s0 + $0xa4] sm:$0xf]
  %v1160 = vld [vmem:[%s0 + $0xa8] sm:$0xf]
  %v1161 = vld [vmem:[%s0 + $0xac] sm:$0xf]
  %v1162 = vld [vmem:[%s0 + $0xb0] sm:$0xf]
  %v1163 = vld [vmem:[%s0 + $0xb4] sm:$0xf]
  %v1164 = vld [vmem:[%s0 + $0xb8] sm:$0xf]
  %v1165 = vld [vmem:[%s0 + $0xbc] sm:$0xf]
  %v1166 = vld [vmem:[%s0 + $0xc0] sm:$0xf]
  %v1167 = vld [vmem:[%s0 + $0xc4] sm:$0xf]
  %v1168 = vld [vmem:[%s0 + $0xc8] sm:$0xf]
  %v1169 = vld [vmem:[%s0 + $0xcc] sm:$0xf]
  %v1170 = vld [vmem:[%s0 + $0xd0] sm:$0xf]
  %v1171 = vld [vmem:[%s0 + $0xd4] sm:$0xf]
  %v1172 = vld [vmem:[%s0 + $0xd8] sm:$0xf]
  %v1173 = vld [vmem:[%s0 + $0xdc] sm:$0xf]
  %v1174 = vld [vmem:[%s0 + $0xe0] sm:$0xf]
  %v1175 = vld [vmem:[%s0 + $0xe4] sm:$0xf]
  %v1176 = vld [vmem:[%s0 + $0xe8] sm:$0xf]
  %v1177 = vld [vmem:[%s0 + $0xec] sm:$0xf]
  %v1178 = vld [vmem:[%s0 + $0xf0] sm:$0xf]
  %v1179 = vld [vmem:[%s0 + $0xf4] sm:$0xf]
  %v1180 = vld [vmem:[%s0 + $0xf8] sm:$0xf]
  %v1181 = vld [vmem:[%s0 + $0xfc] sm:$0xf]
  %v1214 = vunpack.c.l.b16 %v1150
  %v1215 = vunpack.c.l.b16 %v1151
  %v1216 = vunpack.c.l.b16 %v1152
  %v1217 = vunpack.c.l.b16 %v1153
  %v1218 = vunpack.c.l.b16 %v1154
  %v1219 = vunpack.c.l.b16 %v1155
  %v1220 = vunpack.c.l.b16 %v1156
  %v1221 = vunpack.c.l.b16 %v1157
  %v1222 = vunpack.c.l.b16 %v1158
  %v1223 = vunpack.c.l.b16 %v1159
  %v1224 = vunpack.c.l.b16 %v1160
  %v1225 = vunpack.c.l.b16 %v1161
  %v1226 = vunpack.c.l.b16 %v1162
  %v1227 = vunpack.c.l.b16 %v1163
  %v1228 = vunpack.c.l.b16 %v1164
  %v1229 = vunpack.c.l.b16 %v1165
  %v1230 = vunpack.c.l.b16 %v1166
  %v1231 = vunpack.c.l.b16 %v1167
  %v1232 = vunpack.c.l.b16 %v1168
  %v1233 = vunpack.c.l.b16 %v1169
  %v1234 = vunpack.c.l.b16 %v1170
  %v1235 = vunpack.c.l.b16 %v1171
  %v1236 = vunpack.c.l.b16 %v1172
  %v1237 = vunpack.c.l.b16 %v1173
  %v1238 = vunpack.c.l.b16 %v1174
  %v1239 = vunpack.c.l.b16 %v1175
  %v1240 = vunpack.c.l.b16 %v1176
  %v1241 = vunpack.c.l.b16 %v1177
  %v1242 = vunpack.c.l.b16 %v1178
  %v1243 = vunpack.c.l.b16 %v1179
  %v1244 = vunpack.c.l.b16 %v1180
  %v1245 = vunpack.c.l.b16 %v1181
  %v1246 = vpack.c.b16 %v1215, %v1214
  %v1247 = vpack.c.b16 %v1217, %v1216
  %v1248 = vpack.c.b16 %v1219, %v1218
  %v1249 = vpack.c.b16 %v1221, %v1220
  %v1250 = vpack.c.b16 %v1223, %v1222
  %v1251 = vpack.c.b16 %v1225, %v1224
  %v1252 = vpack.c.b16 %v1227, %v1226
  %v1253 = vpack.c.b16 %v1229, %v1228
  %v1254 = vpack.c.b16 %v1231, %v1230
  %v1255 = vpack.c.b16 %v1233, %v1232
  %v1256 = vpack.c.b16 %v1235, %v1234
  %v1257 = vpack.c.b16 %v1237, %v1236
  %v1258 = vpack.c.b16 %v1239, %v1238
  %v1259 = vpack.c.b16 %v1241, %v1240
  %v1260 = vpack.c.b16 %v1243, %v1242
  %v1261 = vpack.c.b16 %v1245, %v1244
  %v1263 = vsel %vm172, %v1246, 0
  %v1266 = vsel %vm172, %v1247, 0
  %v1269 = vsel %vm172, %v1248, 0
  %v1272 = vsel %vm172, %v1249, 0
  %v1275 = vsel %vm172, %v1250, 0
  %v1278 = vsel %vm172, %v1251, 0
  %v1281 = vsel %vm172, %v1252, 0
  %v1284 = vsel %vm172, %v1253, 0
  %v1287 = vsel %vm172, %v1254, 0
  %v1290 = vsel %vm172, %v1255, 0
  %v1293 = vsel %vm172, %v1256, 0
  %v1296 = vsel %vm172, %v1257, 0
  %v1299 = vsel %vm172, %v1258, 0
  %v1302 = vsel %vm172, %v1259, 0
  %v1305 = vsel %vm172, %v1260, 0
  %v1308 = vsel %vm172, %v1261, 0
  %1310 = vmatprep.subr.bf16.mxu0 0
  %1311 = vmatpush1.bf16.msra.mxu0 %v170
  %1312 = vmatprep.subr.bf16.mxu0 0
  %1313 = vmatpush1.bf16.msra.mxu0 0
  %1314 = vmatprep.subr.bf16.mxu0 0
  %1315 = vmatpush1.bf16.msra.mxu0 0
  %1316 = vmatprep.subr.bf16.mxu0 0
  %1317 = vmatpush1.bf16.msra.mxu0 0
  %1318 = vmatprep.subr.bf16.mxu0 0
  %1319 = vmatpush1.bf16.msra.mxu0 0
  %1320 = vmatprep.subr.bf16.mxu0 0
  %1321 = vmatpush1.bf16.msra.mxu0 0
  %1322 = vmatprep.subr.bf16.mxu0 0
  %1323 = vmatpush1.bf16.msra.mxu0 0
  %1324 = vmatprep.subr.bf16.mxu0 0
  %1325 = vmatpush1.bf16.msra.mxu0 0
  %1326 = vmatprep.subr.bf16.mxu0 0
  %1327 = vmatpush1.bf16.msra.mxu0 0
  %1328 = vmatprep.subr.bf16.mxu0 0
  %1329 = vmatpush1.bf16.msra.mxu0 0
  %1330 = vmatprep.subr.bf16.mxu0 0
  %1331 = vmatpush1.bf16.msra.mxu0 0
  %1332 = vmatprep.subr.bf16.mxu0 0
  %1333 = vmatpush1.bf16.msra.mxu0 0
  %1334 = vmatprep.subr.bf16.mxu0 0
  %1335 = vmatpush1.bf16.msra.mxu0 0
  %1336 = vmatprep.subr.bf16.mxu0 0
  %1337 = vmatpush1.bf16.msra.mxu0 0
  %1338 = vmatprep.subr.bf16.mxu0 0
  %1339 = vmatpush1.bf16.msra.mxu0 0
  %1340 = vmatprep.subr.bf16.mxu0 0
  %1341 = vmatpush1.bf16.msra.mxu0 0
  %1342 = vmatprep.mubr.bf16.mxu0 0
  %1343 = vmatmul.mubr.bf16.gmra.mrb[0].mxu0 %v1263
  %v1344 = vpop.f32.mrb[0].mxu0
  %v1345 = vadd.f32 %v84, %v1344
  %v1346 = vpop.f32.mrb[0].mxu0
  %v1347 = vpop.f32.mrb[0].mxu0
  %v1348 = vadd.f32 %v84, %v1347
  %v1349 = vpop.f32.mrb[0].mxu0
  %1350 = vmatprep.mubr.bf16.mxu0 0
  %1351 = vmatmul.mubr.bf16.gmra.mrb[0].mxu0 %v1266
  %v1352 = vpop.f32.mrb[0].mxu0
  %v1353 = vadd.f32 %v84, %v1352
  %v1354 = vpop.f32.mrb[0].mxu0
  %v1355 = vpop.f32.mrb[0].mxu0
  %v1356 = vadd.f32 %v84, %v1355
  %v1357 = vpop.f32.mrb[0].mxu0
  %1358 = vmatprep.mubr.bf16.mxu0 0
  %1359 = vmatmul.mubr.bf16.gmra.mrb[0].mxu0 %v1269
  %v1360 = vpop.f32.mrb[0].mxu0
  %v1361 = vadd.f32 %v84, %v1360
  %v1362 = vpop.f32.mrb[0].mxu0
  %v1363 = vpop.f32.mrb[0].mxu0
  %v1364 = vadd.f32 %v84, %v1363
  %v1365 = vpop.f32.mrb[0].mxu0
  %1366 = vmatprep.mubr.bf16.mxu0 0
  %1367 = vmatmul.mubr.bf16.gmra.mrb[0].mxu0 %v1272
  %v1368 = vpop.f32.mrb[0].mxu0
  %v1369 = vadd.f32 %v84, %v1368
  %v1370 = vpop.f32.mrb[0].mxu0
  %v1371 = vpop.f32.mrb[0].mxu0
  %v1372 = vadd.f32 %v84, %v1371
  %v1373 = vpop.f32.mrb[0].mxu0
  %1374 = vmatprep.mubr.bf16.mxu0 0
  %1375 = vmatmul.mubr.bf16.gmra.mrb[0].mxu0 %v1275
  %v1376 = vpop.f32.mrb[0].mxu0
  %v1377 = vadd.f32 %v84, %v1376
  %v1378 = vpop.f32.mrb[0].mxu0
  %v1379 = vpop.f32.mrb[0].mxu0
  %v1380 = vadd.f32 %v84, %v1379
  %v1381 = vpop.f32.mrb[0].mxu0
  %1382 = vmatprep.mubr.bf16.mxu0 0
  %1383 = vmatmul.mubr.bf16.gmra.mrb[0].mxu0 %v1278
  %v1384 = vpop.f32.mrb[0].mxu0
  %v1385 = vadd.f32 %v84, %v1384
  %v1386 = vpop.f32.mrb[0].mxu0
  %v1387 = vpop.f32.mrb[0].mxu0
  %v1388 = vadd.f32 %v84, %v1387
  %v1389 = vpop.f32.mrb[0].mxu0
  %1390 = vmatprep.mubr.bf16.mxu0 0
  %1391 = vmatmul.mubr.bf16.gmra.mrb[0].mxu0 %v1281
  %v1392 = vpop.f32.mrb[0].mxu0
  %v1393 = vadd.f32 %v84, %v1392
  %v1394 = vpop.f32.mrb[0].mxu0
  %v1395 = vpop.f32.mrb[0].mxu0
  %v1396 = vadd.f32 %v84, %v1395
  %v1397 = vpop.f32.mrb[0].mxu0
  %1398 = vmatprep.mubr.bf16.mxu0 0
  %1399 = vmatmul.mubr.bf16.gmra.mrb[0].mxu0 %v1284
  %v1400 = vpop.f32.mrb[0].mxu0
  %v1401 = vadd.f32 %v84, %v1400
  %v1402 = vpop.f32.mrb[0].mxu0
  %v1403 = vpop.f32.mrb[0].mxu0
  %v1404 = vadd.f32 %v84, %v1403
  %v1405 = vpop.f32.mrb[0].mxu0
  %1406 = vmatprep.mubr.bf16.mxu0 0
  %1407 = vmatmul.mubr.bf16.gmra.mrb[0].mxu0 %v1287
  %v1408 = vpop.f32.mrb[0].mxu0
  %v1409 = vadd.f32 %v84, %v1408
  %v1410 = vpop.f32.mrb[0].mxu0
  %v1411 = vpop.f32.mrb[0].mxu0
  %v1412 = vadd.f32 %v84, %v1411
  %v1413 = vpop.f32.mrb[0].mxu0
  %1414 = vmatprep.mubr.bf16.mxu0 0
  %1415 = vmatmul.mubr.bf16.gmra.mrb[0].mxu0 %v1290
  %v1416 = vpop.f32.mrb[0].mxu0
  %v1417 = vadd.f32 %v84, %v1416
  %v1418 = vpop.f32.mrb[0].mxu0
  %v1419 = vpop.f32.mrb[0].mxu0
  %v1420 = vadd.f32 %v84, %v1419
  %v1421 = vpop.f32.mrb[0].mxu0
  %1422 = vmatprep.mubr.bf16.mxu0 0
  %1423 = vmatmul.mubr.bf16.gmra.mrb[0].mxu0 %v1293
  %v1424 = vpop.f32.mrb[0].mxu0
  %v1425 = vadd.f32 %v84, %v1424
  %v1426 = vpop.f32.mrb[0].mxu0
  %v1427 = vpop.f32.mrb[0].mxu0
  %v1428 = vadd.f32 %v84, %v1427
  %v1429 = vpop.f32.mrb[0].mxu0
  %1430 = vmatprep.mubr.bf16.mxu0 0
  %1431 = vmatmul.mubr.bf16.gmra.mrb[0].mxu0 %v1296
  %v1432 = vpop.f32.mrb[0].mxu0
  %v1433 = vadd.f32 %v84, %v1432
  %v1434 = vpop.f32.mrb[0].mxu0
  %v1435 = vpop.f32.mrb[0].mxu0
  %v1436 = vadd.f32 %v84, %v1435
  %v1437 = vpop.f32.mrb[0].mxu0
  %1438 = vmatprep.mubr.bf16.mxu0 0
  %1439 = vmatmul.mubr.bf16.gmra.mrb[0].mxu0 %v1299
  %v1440 = vpop.f32.mrb[0].mxu0
  %v1441 = vadd.f32 %v84, %v1440
  %v1442 = vpop.f32.mrb[0].mxu0
  %v1443 = vpop.f32.mrb[0].mxu0
  %v1444 = vadd.f32 %v84, %v1443
  %v1445 = vpop.f32.mrb[0].mxu0
  %1446 = vmatprep.mubr.bf16.mxu0 0
  %1447 = vmatmul.mubr.bf16.gmra.mrb[0].mxu0 %v1302
  %v1448 = vpop.f32.mrb[0].mxu0
  %v1449 = vadd.f32 %v84, %v1448
  %v1450 = vpop.f32.mrb[0].mxu0
  %v1451 = vpop.f32.mrb[0].mxu0
  %v1452 = vadd.f32 %v84, %v1451
  %v1453 = vpop.f32.mrb[0].mxu0
  %1454 = vmatprep.mubr.bf16.mxu0 0
  %1455 = vmatmul.mubr.bf16.gmra.mrb[0].mxu0 %v1305
  %v1456 = vpop.f32.mrb[0].mxu0
  %v1457 = vadd.f32 %v84, %v1456
  %v1458 = vpop.f32.mrb[0].mxu0
  %v1459 = vpop.f32.mrb[0].mxu0
  %v1460 = vadd.f32 %v84, %v1459
  %v1461 = vpop.f32.mrb[0].mxu0
  %1462 = vmatprep.mubr.bf16.mxu0 0
  %1463 = vmatmul.mubr.bf16.gmra.mrb[0].mxu0 %v1308
  %v1464 = vpop.f32.mrb[0].mxu0
  %v1465 = vadd.f32 %v84, %v1464
  %v1466 = vpop.f32.mrb[0].mxu0
  %v1467 = vpop.f32.mrb[0].mxu0
  %v1468 = vadd.f32 %v84, %v1467
  %v1469 = vpop.f32.mrb[0].mxu0
  %1470 = vdwg.mxu0
  %vm1471 = vcmp.gt.f32.partialorder %v1345, 0.0
  %vm1472 = vcmp.gt.f32.partialorder %v1348, 0.0
  %vm1473 = vcmp.gt.f32.partialorder %v1353, 0.0
  %vm1474 = vcmp.gt.f32.partialorder %v1356, 0.0
  %vm1475 = vcmp.gt.f32.partialorder %v1361, 0.0
  %vm1476 = vcmp.gt.f32.partialorder %v1364, 0.0
  %vm1477 = vcmp.gt.f32.partialorder %v1369, 0.0
  %vm1478 = vcmp.gt.f32.partialorder %v1372, 0.0
  %vm1479 = vcmp.gt.f32.partialorder %v1377, 0.0
  %vm1480 = vcmp.gt.f32.partialorder %v1380, 0.0
  %vm1481 = vcmp.gt.f32.partialorder %v1385, 0.0
  %vm1482 = vcmp.gt.f32.partialorder %v1388, 0.0
  %vm1483 = vcmp.gt.f32.partialorder %v1393, 0.0
  %vm1484 = vcmp.gt.f32.partialorder %v1396, 0.0
  %vm1485 = vcmp.gt.f32.partialorder %v1401, 0.0
  %vm1486 = vcmp.gt.f32.partialorder %v1404, 0.0
  %vm1487 = vcmp.gt.f32.partialorder %v1409, 0.0
  %vm1488 = vcmp.gt.f32.partialorder %v1412, 0.0
  %vm1489 = vcmp.gt.f32.partialorder %v1417, 0.0
  %vm1490 = vcmp.gt.f32.partialorder %v1420, 0.0
  %vm1491 = vcmp.gt.f32.partialorder %v1425, 0.0
  %vm1492 = vcmp.gt.f32.partialorder %v1428, 0.0
  %vm1493 = vcmp.gt.f32.partialorder %v1433, 0.0
  %vm1494 = vcmp.gt.f32.partialorder %v1436, 0.0
  %vm1495 = vcmp.gt.f32.partialorder %v1441, 0.0
  %vm1496 = vcmp.gt.f32.partialorder %v1444, 0.0
  %vm1497 = vcmp.gt.f32.partialorder %v1449, 0.0
  %vm1498 = vcmp.gt.f32.partialorder %v1452, 0.0
  %vm1499 = vcmp.gt.f32.partialorder %v1457, 0.0
  %vm1500 = vcmp.gt.f32.partialorder %v1460, 0.0
  %vm1501 = vcmp.gt.f32.partialorder %v1465, 0.0
  %vm1502 = vcmp.gt.f32.partialorder %v1468, 0.0
  %v1503 = vmul.f32 %v1345, 0.01
  %v1504 = vmul.f32 %v1348, 0.01
  %v1505 = vmul.f32 %v1353, 0.01
  %v1506 = vmul.f32 %v1356, 0.01
  %v1507 = vmul.f32 %v1361, 0.01
  %v1508 = vmul.f32 %v1364, 0.01
  %v1509 = vmul.f32 %v1369, 0.01
  %v1510 = vmul.f32 %v1372, 0.01
  %v1511 = vmul.f32 %v1377, 0.01
  %v1512 = vmul.f32 %v1380, 0.01
  %v1513 = vmul.f32 %v1385, 0.01
  %v1514 = vmul.f32 %v1388, 0.01
  %v1515 = vmul.f32 %v1393, 0.01
  %v1516 = vmul.f32 %v1396, 0.01
  %v1517 = vmul.f32 %v1401, 0.01
  %v1518 = vmul.f32 %v1404, 0.01
  %v1519 = vmul.f32 %v1409, 0.01
  %v1520 = vmul.f32 %v1412, 0.01
  %v1521 = vmul.f32 %v1417, 0.01
  %v1522 = vmul.f32 %v1420, 0.01
  %v1523 = vmul.f32 %v1425, 0.01
  %v1524 = vmul.f32 %v1428, 0.01
  %v1525 = vmul.f32 %v1433, 0.01
  %v1526 = vmul.f32 %v1436, 0.01
  %v1527 = vmul.f32 %v1441, 0.01
  %v1528 = vmul.f32 %v1444, 0.01
  %v1529 = vmul.f32 %v1449, 0.01
  %v1530 = vmul.f32 %v1452, 0.01
  %v1531 = vmul.f32 %v1457, 0.01
  %v1532 = vmul.f32 %v1460, 0.01
  %v1533 = vmul.f32 %v1465, 0.01
  %v1534 = vmul.f32 %v1468, 0.01
  %v1535 = vsel %vm1471, %v1345, %v1503
  %v1536 = vsel %vm1472, %v1348, %v1504
  %v1537 = vsel %vm1473, %v1353, %v1505
  %v1538 = vsel %vm1474, %v1356, %v1506
  %v1539 = vsel %vm1475, %v1361, %v1507
  %v1540 = vsel %vm1476, %v1364, %v1508
  %v1541 = vsel %vm1477, %v1369, %v1509
  %v1542 = vsel %vm1478, %v1372, %v1510
  %v1543 = vsel %vm1479, %v1377, %v1511
  %v1544 = vsel %vm1480, %v1380, %v1512
  %v1545 = vsel %vm1481, %v1385, %v1513
  %v1546 = vsel %vm1482, %v1388, %v1514
  %v1547 = vsel %vm1483, %v1393, %v1515
  %v1548 = vsel %vm1484, %v1396, %v1516
  %v1549 = vsel %vm1485, %v1401, %v1517
  %v1550 = vsel %vm1486, %v1404, %v1518
  %v1551 = vsel %vm1487, %v1409, %v1519
  %v1552 = vsel %vm1488, %v1412, %v1520
  %v1553 = vsel %vm1489, %v1417, %v1521
  %v1554 = vsel %vm1490, %v1420, %v1522
  %v1555 = vsel %vm1491, %v1425, %v1523
  %v1556 = vsel %vm1492, %v1428, %v1524
  %v1557 = vsel %vm1493, %v1433, %v1525
  %v1558 = vsel %vm1494, %v1436, %v1526
  %v1559 = vsel %vm1495, %v1441, %v1527
  %v1560 = vsel %vm1496, %v1444, %v1528
  %v1561 = vsel %vm1497, %v1449, %v1529
  %v1562 = vsel %vm1498, %v1452, %v1530
  %v1563 = vsel %vm1499, %v1457, %v1531
  %v1564 = vsel %vm1500, %v1460, %v1532
  %v1565 = vsel %vm1501, %v1465, %v1533
  %v1566 = vsel %vm1502, %v1468, %v1534
  %v1567 = vpack.c.bf16 %v1536, %v1535
  %v1568 = vpack.c.bf16 %v1538, %v1537
  %v1569 = vpack.c.bf16 %v1540, %v1539
  %v1570 = vpack.c.bf16 %v1542, %v1541
  %v1571 = vpack.c.bf16 %v1544, %v1543
  %v1572 = vpack.c.bf16 %v1546, %v1545
  %v1573 = vpack.c.bf16 %v1548, %v1547
  %v1574 = vpack.c.bf16 %v1550, %v1549
  %v1575 = vpack.c.bf16 %v1552, %v1551
  %v1576 = vpack.c.bf16 %v1554, %v1553
  %v1577 = vpack.c.bf16 %v1556, %v1555
  %v1578 = vpack.c.bf16 %v1558, %v1557
  %v1579 = vpack.c.bf16 %v1560, %v1559
  %v1580 = vpack.c.bf16 %v1562, %v1561
  %v1581 = vpack.c.bf16 %v1564, %v1563
  %v1582 = vpack.c.bf16 %v1566, %v1565
  %v1584 = vsel %vm524, %v1567, 0
  %v1587 = vsel %vm524, %v1568, 0
  %v1590 = vsel %vm524, %v1569, 0
  %v1593 = vsel %vm524, %v1570, 0
  %v1596 = vsel %vm524, %v1571, 0
  %v1599 = vsel %vm524, %v1572, 0
  %v1602 = vsel %vm524, %v1573, 0
  %v1605 = vsel %vm524, %v1574, 0
  %v1608 = vsel %vm524, %v1575, 0
  %v1611 = vsel %vm524, %v1576, 0
  %v1614 = vsel %vm524, %v1577, 0
  %v1617 = vsel %vm524, %v1578, 0
  %v1620 = vsel %vm524, %v1579, 0
  %v1623 = vsel %vm524, %v1580, 0
  %v1626 = vsel %vm524, %v1581, 0
  %v1629 = vsel %vm524, %v1582, 0
  %1631 = vmatprep.subr.bf16.mxu0 0
  %1632 = vmatpush1.bf16.msra.mxu0 %v516
  %1633 = vmatprep.subr.bf16.mxu0 0
  %1634 = vmatpush1.bf16.msra.mxu0 %v517
  %1635 = vmatprep.subr.bf16.mxu0 0
  %1636 = vmatpush1.bf16.msra.mxu0 %v518
  %1637 = vmatprep.subr.bf16.mxu0 0
  %1638 = vmatpush1.bf16.msra.mxu0 %v519
  %1639 = vmatprep.subr.bf16.mxu0 0
  %1640 = vmatpush1.bf16.msra.mxu0 0
  %1641 = vmatprep.subr.bf16.mxu0 0
  %1642 = vmatpush1.bf16.msra.mxu0 0
  %1643 = vmatprep.subr.bf16.mxu0 0
  %1644 = vmatpush1.bf16.msra.mxu0 0
  %1645 = vmatprep.subr.bf16.mxu0 0
  %1646 = vmatpush1.bf16.msra.mxu0 0
  %1647 = vmatprep.subr.bf16.mxu0 0
  %1648 = vmatpush1.bf16.msra.mxu0 0
  %1649 = vmatprep.subr.bf16.mxu0 0
  %1650 = vmatpush1.bf16.msra.mxu0 0
  %1651 = vmatprep.subr.bf16.mxu0 0
  %1652 = vmatpush1.bf16.msra.mxu0 0
  %1653 = vmatprep.subr.bf16.mxu0 0
  %1654 = vmatpush1.bf16.msra.mxu0 0
  %1655 = vmatprep.subr.bf16.mxu0 0
  %1656 = vmatpush1.bf16.msra.mxu0 0
  %1657 = vmatprep.subr.bf16.mxu0 0
  %1658 = vmatpush1.bf16.msra.mxu0 0
  %1659 = vmatprep.subr.bf16.mxu0 0
  %1660 = vmatpush1.bf16.msra.mxu0 0
  %1661 = vmatprep.subr.bf16.mxu0 0
  %1662 = vmatpush1.bf16.msra.mxu0 0
  %1663 = vmatprep.mubr.bf16.mxu0 0
  %1664 = vmatmul.mubr.bf16.gmra.mrb[0].mxu0 %v1584
  %v1665 = vpop.f32.mrb[0].mxu0
  %v1666 = vadd.f32 %v498, %v1665
  %v1667 = vpop.f32.mrb[0].mxu0
  %v1668 = vpop.f32.mrb[0].mxu0
  %v1669 = vadd.f32 %v498, %v1668
  %v1670 = vpop.f32.mrb[0].mxu0
  %1671 = vmatprep.mubr.bf16.mxu0 0
  %1672 = vmatmul.mubr.bf16.gmra.mrb[0].mxu0 %v1587
  %v1673 = vpop.f32.mrb[0].mxu0
  %v1674 = vadd.f32 %v498, %v1673
  %v1675 = vpop.f32.mrb[0].mxu0
  %v1676 = vpop.f32.mrb[0].mxu0
  %v1677 = vadd.f32 %v498, %v1676
  %v1678 = vpop.f32.mrb[0].mxu0
  %1679 = vmatprep.mubr.bf16.mxu0 0
  %1680 = vmatmul.mubr.bf16.gmra.mrb[0].mxu0 %v1590
  %v1681 = vpop.f32.mrb[0].mxu0
  %v1682 = vadd.f32 %v498, %v1681
  %v1683 = vpop.f32.mrb[0].mxu0
  %v1684 = vpop.f32.mrb[0].mxu0
  %v1685 = vadd.f32 %v498, %v1684
  %v1686 = vpop.f32.mrb[0].mxu0
  %1687 = vmatprep.mubr.bf16.mxu0 0
  %1688 = vmatmul.mubr.bf16.gmra.mrb[0].mxu0 %v1593
  %v1689 = vpop.f32.mrb[0].mxu0
  %v1690 = vadd.f32 %v498, %v1689
  %v1691 = vpop.f32.mrb[0].mxu0
  %v1692 = vpop.f32.mrb[0].mxu0
  %v1693 = vadd.f32 %v498, %v1692
  %v1694 = vpop.f32.mrb[0].mxu0
  %1695 = vmatprep.mubr.bf16.mxu0 0
  %1696 = vmatmul.mubr.bf16.gmra.mrb[0].mxu0 %v1596
  %v1697 = vpop.f32.mrb[0].mxu0
  %v1698 = vadd.f32 %v498, %v1697
  %v1699 = vpop.f32.mrb[0].mxu0
  %v1700 = vpop.f32.mrb[0].mxu0
  %v1701 = vadd.f32 %v498, %v1700
  %v1702 = vpop.f32.mrb[0].mxu0
  %1703 = vmatprep.mubr.bf16.mxu0 0
  %1704 = vmatmul.mubr.bf16.gmra.mrb[0].mxu0 %v1599
  %v1705 = vpop.f32.mrb[0].mxu0
  %v1706 = vadd.f32 %v498, %v1705
  %v1707 = vpop.f32.mrb[0].mxu0
  %v1708 = vpop.f32.mrb[0].mxu0
  %v1709 = vadd.f32 %v498, %v1708
  %v1710 = vpop.f32.mrb[0].mxu0
  %1711 = vmatprep.mubr.bf16.mxu0 0
  %1712 = vmatmul.mubr.bf16.gmra.mrb[0].mxu0 %v1602
  %v1713 = vpop.f32.mrb[0].mxu0
  %v1714 = vadd.f32 %v498, %v1713
  %v1715 = vpop.f32.mrb[0].mxu0
  %v1716 = vpop.f32.mrb[0].mxu0
  %v1717 = vadd.f32 %v498, %v1716
  %v1718 = vpop.f32.mrb[0].mxu0
  %1719 = vmatprep.mubr.bf16.mxu0 0
  %1720 = vmatmul.mubr.bf16.gmra.mrb[0].mxu0 %v1605
  %v1721 = vpop.f32.mrb[0].mxu0
  %v1722 = vadd.f32 %v498, %v1721
  %v1723 = vpop.f32.mrb[0].mxu0
  %v1724 = vpop.f32.mrb[0].mxu0
  %v1725 = vadd.f32 %v498, %v1724
  %v1726 = vpop.f32.mrb[0].mxu0
  %1727 = vmatprep.mubr.bf16.mxu0 0
  %1728 = vmatmul.mubr.bf16.gmra.mrb[0].mxu0 %v1608
  %v1729 = vpop.f32.mrb[0].mxu0
  %v1730 = vadd.f32 %v498, %v1729
  %v1731 = vpop.f32.mrb[0].mxu0
  %v1732 = vpop.f32.mrb[0].mxu0
  %v1733 = vadd.f32 %v498, %v1732
  %v1734 = vpop.f32.mrb[0].mxu0
  %1735 = vmatprep.mubr.bf16.mxu0 0
  %1736 = vmatmul.mubr.bf16.gmra.mrb[0].mxu0 %v1611
  %v1737 = vpop.f32.mrb[0].mxu0
  %v1738 = vadd.f32 %v498, %v1737
  %v1739 = vpop.f32.mrb[0].mxu0
  %v1740 = vpop.f32.mrb[0].mxu0
  %v1741 = vadd.f32 %v498, %v1740
  %v1742 = vpop.f32.mrb[0].mxu0
  %1743 = vmatprep.mubr.bf16.mxu0 0
  %1744 = vmatmul.mubr.bf16.gmra.mrb[0].mxu0 %v1614
  %v1745 = vpop.f32.mrb[0].mxu0
  %v1746 = vadd.f32 %v498, %v1745
  %v1747 = vpop.f32.mrb[0].mxu0
  %v1748 = vpop.f32.mrb[0].mxu0
  %v1749 = vadd.f32 %v498, %v1748
  %v1750 = vpop.f32.mrb[0].mxu0
  %1751 = vmatprep.mubr.bf16.mxu0 0
  %1752 = vmatmul.mubr.bf16.gmra.mrb[0].mxu0 %v1617
  %v1753 = vpop.f32.mrb[0].mxu0
  %v1754 = vadd.f32 %v498, %v1753
  %v1755 = vpop.f32.mrb[0].mxu0
  %v1756 = vpop.f32.mrb[0].mxu0
  %v1757 = vadd.f32 %v498, %v1756
  %v1758 = vpop.f32.mrb[0].mxu0
  %1759 = vmatprep.mubr.bf16.mxu0 0
  %1760 = vmatmul.mubr.bf16.gmra.mrb[0].mxu0 %v1620
  %v1761 = vpop.f32.mrb[0].mxu0
  %v1762 = vadd.f32 %v498, %v1761
  %v1763 = vpop.f32.mrb[0].mxu0
  %v1764 = vpop.f32.mrb[0].mxu0
  %v1765 = vadd.f32 %v498, %v1764
  %v1766 = vpop.f32.mrb[0].mxu0
  %1767 = vmatprep.mubr.bf16.mxu0 0
  %1768 = vmatmul.mubr.bf16.gmra.mrb[0].mxu0 %v1623
  %v1769 = vpop.f32.mrb[0].mxu0
  %v1770 = vadd.f32 %v498, %v1769
  %v1771 = vpop.f32.mrb[0].mxu0
  %v1772 = vpop.f32.mrb[0].mxu0
  %v1773 = vadd.f32 %v498, %v1772
  %v1774 = vpop.f32.mrb[0].mxu0
  %1775 = vmatprep.mubr.bf16.mxu0 0
  %1776 = vmatmul.mubr.bf16.gmra.mrb[0].mxu0 %v1626
  %v1777 = vpop.f32.mrb[0].mxu0
  %v1778 = vadd.f32 %v498, %v1777
  %v1779 = vpop.f32.mrb[0].mxu0
  %v1780 = vpop.f32.mrb[0].mxu0
  %v1781 = vadd.f32 %v498, %v1780
  %v1782 = vpop.f32.mrb[0].mxu0
  %1783 = vmatprep.mubr.bf16.mxu0 0
  %1784 = vmatmul.mubr.bf16.gmra.mrb[0].mxu0 %v1629
  %v1785 = vpop.f32.mrb[0].mxu0
  %v1786 = vadd.f32 %v498, %v1785
  %v1787 = vpop.f32.mrb[0].mxu0
  %v1788 = vpop.f32.mrb[0].mxu0
  %v1789 = vadd.f32 %v498, %v1788
  %v1790 = vpop.f32.mrb[0].mxu0
  %1791 = vdwg.mxu0
  %vm1792 = vcmp.gt.f32.partialorder %v1666, 0.0
  %vm1793 = vcmp.gt.f32.partialorder %v1669, 0.0
  %vm1794 = vcmp.gt.f32.partialorder %v1674, 0.0
  %vm1795 = vcmp.gt.f32.partialorder %v1677, 0.0
  %vm1796 = vcmp.gt.f32.partialorder %v1682, 0.0
  %vm1797 = vcmp.gt.f32.partialorder %v1685, 0.0
  %vm1798 = vcmp.gt.f32.partialorder %v1690, 0.0
  %vm1799 = vcmp.gt.f32.partialorder %v1693, 0.0
  %vm1800 = vcmp.gt.f32.partialorder %v1698, 0.0
  %vm1801 = vcmp.gt.f32.partialorder %v1701, 0.0
  %vm1802 = vcmp.gt.f32.partialorder %v1706, 0.0
  %vm1803 = vcmp.gt.f32.partialorder %v1709, 0.0
  %vm1804 = vcmp.gt.f32.partialorder %v1714, 0.0
  %vm1805 = vcmp.gt.f32.partialorder %v1717, 0.0
  %vm1806 = vcmp.gt.f32.partialorder %v1722, 0.0
  %vm1807 = vcmp.gt.f32.partialorder %v1725, 0.0
  %vm1808 = vcmp.gt.f32.partialorder %v1730, 0.0
  %vm1809 = vcmp.gt.f32.partialorder %v1733, 0.0
  %vm1810 = vcmp.gt.f32.partialorder %v1738, 0.0
  %vm1811 = vcmp.gt.f32.partialorder %v1741, 0.0
  %vm1812 = vcmp.gt.f32.partialorder %v1746, 0.0
  %vm1813 = vcmp.gt.f32.partialorder %v1749, 0.0
  %vm1814 = vcmp.gt.f32.partialorder %v1754, 0.0
  %vm1815 = vcmp.gt.f32.partialorder %v1757, 0.0
  %vm1816 = vcmp.gt.f32.partialorder %v1762, 0.0
  %vm1817 = vcmp.gt.f32.partialorder %v1765, 0.0
  %vm1818 = vcmp.gt.f32.partialorder %v1770, 0.0
  %vm1819 = vcmp.gt.f32.partialorder %v1773, 0.0
  %vm1820 = vcmp.gt.f32.partialorder %v1778, 0.0
  %vm1821 = vcmp.gt.f32.partialorder %v1781, 0.0
  %vm1822 = vcmp.gt.f32.partialorder %v1786, 0.0
  %vm1823 = vcmp.gt.f32.partialorder %v1789, 0.0
  %v1824 = vmul.f32 %v1666, 0.01
  %v1825 = vmul.f32 %v1669, 0.01
  %v1826 = vmul.f32 %v1674, 0.01
  %v1827 = vmul.f32 %v1677, 0.01
  %v1828 = vmul.f32 %v1682, 0.01
  %v1829 = vmul.f32 %v1685, 0.01
  %v1830 = vmul.f32 %v1690, 0.01
  %v1831 = vmul.f32 %v1693, 0.01
  %v1832 = vmul.f32 %v1698, 0.01
  %v1833 = vmul.f32 %v1701, 0.01
  %v1834 = vmul.f32 %v1706, 0.01
  %v1835 = vmul.f32 %v1709, 0.01
  %v1836 = vmul.f32 %v1714, 0.01
  %v1837 = vmul.f32 %v1717, 0.01
  %v1838 = vmul.f32 %v1722, 0.01
  %v1839 = vmul.f32 %v1725, 0.01
  %v1840 = vmul.f32 %v1730, 0.01
  %v1841 = vmul.f32 %v1733, 0.01
  %v1842 = vmul.f32 %v1738, 0.01
  %v1843 = vmul.f32 %v1741, 0.01
  %v1844 = vmul.f32 %v1746, 0.01
  %v1845 = vmul.f32 %v1749, 0.01
  %v1846 = vmul.f32 %v1754, 0.01
  %v1847 = vmul.f32 %v1757, 0.01
  %v1848 = vmul.f32 %v1762, 0.01
  %v1849 = vmul.f32 %v1765, 0.01
  %v1850 = vmul.f32 %v1770, 0.01
  %v1851 = vmul.f32 %v1773, 0.01
  %v1852 = vmul.f32 %v1778, 0.01
  %v1853 = vmul.f32 %v1781, 0.01
  %v1854 = vmul.f32 %v1786, 0.01
  %v1855 = vmul.f32 %v1789, 0.01
  %v1856 = vsel %vm1792, %v1666, %v1824
  %v1857 = vsel %vm1793, %v1669, %v1825
  %v1858 = vsel %vm1794, %v1674, %v1826
  %v1859 = vsel %vm1795, %v1677, %v1827
  %v1860 = vsel %vm1796, %v1682, %v1828
  %v1861 = vsel %vm1797, %v1685, %v1829
  %v1862 = vsel %vm1798, %v1690, %v1830
  %v1863 = vsel %vm1799, %v1693, %v1831
  %v1864 = vsel %vm1800, %v1698, %v1832
  %v1865 = vsel %vm1801, %v1701, %v1833
  %v1866 = vsel %vm1802, %v1706, %v1834
  %v1867 = vsel %vm1803, %v1709, %v1835
  %v1868 = vsel %vm1804, %v1714, %v1836
  %v1869 = vsel %vm1805, %v1717, %v1837
  %v1870 = vsel %vm1806, %v1722, %v1838
  %v1871 = vsel %vm1807, %v1725, %v1839
  %v1872 = vsel %vm1808, %v1730, %v1840
  %v1873 = vsel %vm1809, %v1733, %v1841
  %v1874 = vsel %vm1810, %v1738, %v1842
  %v1875 = vsel %vm1811, %v1741, %v1843
  %v1876 = vsel %vm1812, %v1746, %v1844
  %v1877 = vsel %vm1813, %v1749, %v1845
  %v1878 = vsel %vm1814, %v1754, %v1846
  %v1879 = vsel %vm1815, %v1757, %v1847
  %v1880 = vsel %vm1816, %v1762, %v1848
  %v1881 = vsel %vm1817, %v1765, %v1849
  %v1882 = vsel %vm1818, %v1770, %v1850
  %v1883 = vsel %vm1819, %v1773, %v1851
  %v1884 = vsel %vm1820, %v1778, %v1852
  %v1885 = vsel %vm1821, %v1781, %v1853
  %v1886 = vsel %vm1822, %v1786, %v1854
  %v1887 = vsel %vm1823, %v1789, %v1855
  %v1888 = vpack.c.bf16 %v1857, %v1856
  %v1889 = vpack.c.bf16 %v1859, %v1858
  %v1890 = vpack.c.bf16 %v1861, %v1860
  %v1891 = vpack.c.bf16 %v1863, %v1862
  %v1892 = vpack.c.bf16 %v1865, %v1864
  %v1893 = vpack.c.bf16 %v1867, %v1866
  %v1894 = vpack.c.bf16 %v1869, %v1868
  %v1895 = vpack.c.bf16 %v1871, %v1870
  %v1896 = vpack.c.bf16 %v1873, %v1872
  %v1897 = vpack.c.bf16 %v1875, %v1874
  %v1898 = vpack.c.bf16 %v1877, %v1876
  %v1899 = vpack.c.bf16 %v1879, %v1878
  %v1900 = vpack.c.bf16 %v1881, %v1880
  %v1901 = vpack.c.bf16 %v1883, %v1882
  %v1902 = vpack.c.bf16 %v1885, %v1884
  %v1903 = vpack.c.bf16 %v1887, %v1886
  %v1905 = vsel %vm524, %v1888, 0
  %v1908 = vsel %vm524, %v1889, 0
  %v1911 = vsel %vm524, %v1890, 0
  %v1914 = vsel %vm524, %v1891, 0
  %v1917 = vsel %vm524, %v1892, 0
  %v1920 = vsel %vm524, %v1893, 0
  %v1923 = vsel %vm524, %v1894, 0
  %v1926 = vsel %vm524, %v1895, 0
  %v1929 = vsel %vm524, %v1896, 0
  %v1932 = vsel %vm524, %v1897, 0
  %v1935 = vsel %vm524, %v1898, 0
  %v1938 = vsel %vm524, %v1899, 0
  %v1941 = vsel %vm524, %v1900, 0
  %v1944 = vsel %vm524, %v1901, 0
  %v1947 = vsel %vm524, %v1902, 0
  %v1950 = vsel %vm524, %v1903, 0
  %1952 = vmatprep.subr.bf16.mxu0 0
  %1953 = vmatpush1.bf16.msra.mxu0 %v868
  %1954 = vmatprep.subr.bf16.mxu0 0
  %1955 = vmatpush1.bf16.msra.mxu0 %v869
  %1956 = vmatprep.subr.bf16.mxu0 0
  %1957 = vmatpush1.bf16.msra.mxu0 %v870
  %1958 = vmatprep.subr.bf16.mxu0 0
  %1959 = vmatpush1.bf16.msra.mxu0 %v871
  %1960 = vmatprep.subr.bf16.mxu0 0
  %1961 = vmatpush1.bf16.msra.mxu0 0
  %1962 = vmatprep.subr.bf16.mxu0 0
  %1963 = vmatpush1.bf16.msra.mxu0 0
  %1964 = vmatprep.subr.bf16.mxu0 0
  %1965 = vmatpush1.bf16.msra.mxu0 0
  %1966 = vmatprep.subr.bf16.mxu0 0
  %1967 = vmatpush1.bf16.msra.mxu0 0
  %1968 = vmatprep.subr.bf16.mxu0 0
  %1969 = vmatpush1.bf16.msra.mxu0 0
  %1970 = vmatprep.subr.bf16.mxu0 0
  %1971 = vmatpush1.bf16.msra.mxu0 0
  %1972 = vmatprep.subr.bf16.mxu0 0
  %1973 = vmatpush1.bf16.msra.mxu0 0
  %1974 = vmatprep.subr.bf16.mxu0 0
  %1975 = vmatpush1.bf16.msra.mxu0 0
  %1976 = vmatprep.subr.bf16.mxu0 0
  %1977 = vmatpush1.bf16.msra.mxu0 0
  %1978 = vmatprep.subr.bf16.mxu0 0
  %1979 = vmatpush1.bf16.msra.mxu0 0
  %1980 = vmatprep.subr.bf16.mxu0 0
  %1981 = vmatpush1.bf16.msra.mxu0 0
  %1982 = vmatprep.subr.bf16.mxu0 0
  %1983 = vmatpush1.bf16.msra.mxu0 0
  %1984 = vmatprep.mubr.bf16.mxu0 0
  %1985 = vmatmul.mubr.bf16.gmra.mrb[0].mxu0 %v1905
  %v1986 = vpop.f32.mrb[0].mxu0
  %v1987 = vadd.f32 %v850, %v1986
  %v1988 = vpop.f32.mrb[0].mxu0
  %v1989 = vpop.f32.mrb[0].mxu0
  %v1990 = vadd.f32 %v850, %v1989
  %v1991 = vpop.f32.mrb[0].mxu0
  %1992 = vmatprep.mubr.bf16.mxu0 0
  %1993 = vmatmul.mubr.bf16.gmra.mrb[0].mxu0 %v1908
  %v1994 = vpop.f32.mrb[0].mxu0
  %v1995 = vadd.f32 %v850, %v1994
  %v1996 = vpop.f32.mrb[0].mxu0
  %v1997 = vpop.f32.mrb[0].mxu0
  %v1998 = vadd.f32 %v850, %v1997
  %v1999 = vpop.f32.mrb[0].mxu0
  %2000 = vmatprep.mubr.bf16.mxu0 0
  %2001 = vmatmul.mubr.bf16.gmra.mrb[0].mxu0 %v1911
  %v2002 = vpop.f32.mrb[0].mxu0
  %v2003 = vadd.f32 %v850, %v2002
  %v2004 = vpop.f32.mrb[0].mxu0
  %v2005 = vpop.f32.mrb[0].mxu0
  %v2006 = vadd.f32 %v850, %v2005
  %v2007 = vpop.f32.mrb[0].mxu0
  %2008 = vmatprep.mubr.bf16.mxu0 0
  %2009 = vmatmul.mubr.bf16.gmra.mrb[0].mxu0 %v1914
  %v2010 = vpop.f32.mrb[0].mxu0
  %v2011 = vadd.f32 %v850, %v2010
  %v2012 = vpop.f32.mrb[0].mxu0
  %v2013 = vpop.f32.mrb[0].mxu0
  %v2014 = vadd.f32 %v850, %v2013
  %v2015 = vpop.f32.mrb[0].mxu0
  %2016 = vmatprep.mubr.bf16.mxu0 0
  %2017 = vmatmul.mubr.bf16.gmra.mrb[0].mxu0 %v1917
  %v2018 = vpop.f32.mrb[0].mxu0
  %v2019 = vadd.f32 %v850, %v2018
  %v2020 = vpop.f32.mrb[0].mxu0
  %v2021 = vpop.f32.mrb[0].mxu0
  %v2022 = vadd.f32 %v850, %v2021
  %v2023 = vpop.f32.mrb[0].mxu0
  %2024 = vmatprep.mubr.bf16.mxu0 0
  %2025 = vmatmul.mubr.bf16.gmra.mrb[0].mxu0 %v1920
  %v2026 = vpop.f32.mrb[0].mxu0
  %v2027 = vadd.f32 %v850, %v2026
  %v2028 = vpop.f32.mrb[0].mxu0
  %v2029 = vpop.f32.mrb[0].mxu0
  %v2030 = vadd.f32 %v850, %v2029
  %v2031 = vpop.f32.mrb[0].mxu0
  %2032 = vmatprep.mubr.bf16.mxu0 0
  %2033 = vmatmul.mubr.bf16.gmra.mrb[0].mxu0 %v1923
  %v2034 = vpop.f32.mrb[0].mxu0
  %v2035 = vadd.f32 %v850, %v2034
  %v2036 = vpop.f32.mrb[0].mxu0
  %v2037 = vpop.f32.mrb[0].mxu0
  %v2038 = vadd.f32 %v850, %v2037
  %v2039 = vpop.f32.mrb[0].mxu0
  %2040 = vmatprep.mubr.bf16.mxu0 0
  %2041 = vmatmul.mubr.bf16.gmra.mrb[0].mxu0 %v1926
  %v2042 = vpop.f32.mrb[0].mxu0
  %v2043 = vadd.f32 %v850, %v2042
  %v2044 = vpop.f32.mrb[0].mxu0
  %v2045 = vpop.f32.mrb[0].mxu0
  %v2046 = vadd.f32 %v850, %v2045
  %v2047 = vpop.f32.mrb[0].mxu0
  %2048 = vmatprep.mubr.bf16.mxu0 0
  %2049 = vmatmul.mubr.bf16.gmra.mrb[0].mxu0 %v1929
  %v2050 = vpop.f32.mrb[0].mxu0
  %v2051 = vadd.f32 %v850, %v2050
  %v2052 = vpop.f32.mrb[0].mxu0
  %v2053 = vpop.f32.mrb[0].mxu0
  %v2054 = vadd.f32 %v850, %v2053
  %v2055 = vpop.f32.mrb[0].mxu0
  %2056 = vmatprep.mubr.bf16.mxu0 0
  %2057 = vmatmul.mubr.bf16.gmra.mrb[0].mxu0 %v1932
  %v2058 = vpop.f32.mrb[0].mxu0
  %v2059 = vadd.f32 %v850, %v2058
  %v2060 = vpop.f32.mrb[0].mxu0
  %v2061 = vpop.f32.mrb[0].mxu0
  %v2062 = vadd.f32 %v850, %v2061
  %v2063 = vpop.f32.mrb[0].mxu0
  %2064 = vmatprep.mubr.bf16.mxu0 0
  %2065 = vmatmul.mubr.bf16.gmra.mrb[0].mxu0 %v1935
  %v2066 = vpop.f32.mrb[0].mxu0
  %v2067 = vadd.f32 %v850, %v2066
  %v2068 = vpop.f32.mrb[0].mxu0
  %v2069 = vpop.f32.mrb[0].mxu0
  %v2070 = vadd.f32 %v850, %v2069
  %v2071 = vpop.f32.mrb[0].mxu0
  %2072 = vmatprep.mubr.bf16.mxu0 0
  %2073 = vmatmul.mubr.bf16.gmra.mrb[0].mxu0 %v1938
  %v2074 = vpop.f32.mrb[0].mxu0
  %v2075 = vadd.f32 %v850, %v2074
  %v2076 = vpop.f32.mrb[0].mxu0
  %v2077 = vpop.f32.mrb[0].mxu0
  %v2078 = vadd.f32 %v850, %v2077
  %v2079 = vpop.f32.mrb[0].mxu0
  %2080 = vmatprep.mubr.bf16.mxu0 0
  %2081 = vmatmul.mubr.bf16.gmra.mrb[0].mxu0 %v1941
  %v2082 = vpop.f32.mrb[0].mxu0
  %v2083 = vadd.f32 %v850, %v2082
  %v2084 = vpop.f32.mrb[0].mxu0
  %v2085 = vpop.f32.mrb[0].mxu0
  %v2086 = vadd.f32 %v850, %v2085
  %v2087 = vpop.f32.mrb[0].mxu0
  %2088 = vmatprep.mubr.bf16.mxu0 0
  %2089 = vmatmul.mubr.bf16.gmra.mrb[0].mxu0 %v1944
  %v2090 = vpop.f32.mrb[0].mxu0
  %v2091 = vadd.f32 %v850, %v2090
  %v2092 = vpop.f32.mrb[0].mxu0
  %v2093 = vpop.f32.mrb[0].mxu0
  %v2094 = vadd.f32 %v850, %v2093
  %v2095 = vpop.f32.mrb[0].mxu0
  %2096 = vmatprep.mubr.bf16.mxu0 0
  %2097 = vmatmul.mubr.bf16.gmra.mrb[0].mxu0 %v1947
  %v2098 = vpop.f32.mrb[0].mxu0
  %v2099 = vadd.f32 %v850, %v2098
  %v2100 = vpop.f32.mrb[0].mxu0
  %v2101 = vpop.f32.mrb[0].mxu0
  %v2102 = vadd.f32 %v850, %v2101
  %v2103 = vpop.f32.mrb[0].mxu0
  %2104 = vmatprep.mubr.bf16.mxu0 0
  %2105 = vmatmul.mubr.bf16.gmra.mrb[0].mxu0 %v1950
  %v2106 = vpop.f32.mrb[0].mxu0
  %v2107 = vadd.f32 %v850, %v2106
  %v2108 = vpop.f32.mrb[0].mxu0
  %v2109 = vpop.f32.mrb[0].mxu0
  %v2110 = vadd.f32 %v850, %v2109
  %v2111 = vpop.f32.mrb[0].mxu0
  %2112 = vdwg.mxu0
  %v2113 = vtanh.pop %v1987
  %v2114 = vtanh.pop %v1990
  %v2115 = vtanh.pop %v1995
  %v2116 = vtanh.pop %v1998
  %v2117 = vtanh.pop %v2003
  %v2118 = vtanh.pop %v2006
  %v2119 = vtanh.pop %v2011
  %v2120 = vtanh.pop %v2014
  %v2121 = vtanh.pop %v2019
  %v2122 = vtanh.pop %v2022
  %v2123 = vtanh.pop %v2027
  %v2124 = vtanh.pop %v2030
  %v2125 = vtanh.pop %v2035
  %v2126 = vtanh.pop %v2038
  %v2127 = vtanh.pop %v2043
  %v2128 = vtanh.pop %v2046
  %v2129 = vtanh.pop %v2051
  %v2130 = vtanh.pop %v2054
  %v2131 = vtanh.pop %v2059
  %v2132 = vtanh.pop %v2062
  %v2133 = vtanh.pop %v2067
  %v2134 = vtanh.pop %v2070
  %v2135 = vtanh.pop %v2075
  %v2136 = vtanh.pop %v2078
  %v2137 = vtanh.pop %v2083
  %v2138 = vtanh.pop %v2086
  %v2139 = vtanh.pop %v2091
  %v2140 = vtanh.pop %v2094
  %v2141 = vtanh.pop %v2099
  %v2142 = vtanh.pop %v2102
  %v2143 = vtanh.pop %v2107
  %v2144 = vtanh.pop %v2110
  %2145 = vst.msk [vmem:[%s7 + $0x100] sm:$0xff] %vm1117, %v2113
  %2146 = vst.msk [vmem:[%s7 + $0x108] sm:$0xff] %vm1117, %v2114
  %2147 = vst.msk [vmem:[%s7 + $0x110] sm:$0xff] %vm1117, %v2115
  %2148 = vst.msk [vmem:[%s7 + $0x118] sm:$0xff] %vm1117, %v2116
  %2149 = vst.msk [vmem:[%s7 + $0x120] sm:$0xff] %vm1117, %v2117
  %2150 = vst.msk [vmem:[%s7 + $0x128] sm:$0xff] %vm1117, %v2118
  %2151 = vst.msk [vmem:[%s7 + $0x130] sm:$0xff] %vm1117, %v2119
  %2152 = vst.msk [vmem:[%s7 + $0x138] sm:$0xff] %vm1117, %v2120
  %2153 = vst.msk [vmem:[%s7 + $0x140] sm:$0xff] %vm1117, %v2121
  %2154 = vst.msk [vmem:[%s7 + $0x148] sm:$0xff] %vm1117, %v2122
  %2155 = vst.msk [vmem:[%s7 + $0x150] sm:$0xff] %vm1117, %v2123
  %2156 = vst.msk [vmem:[%s7 + $0x158] sm:$0xff] %vm1117, %v2124
  %2157 = vst.msk [vmem:[%s7 + $0x160] sm:$0xff] %vm1117, %v2125
  %2158 = vst.msk [vmem:[%s7 + $0x168] sm:$0xff] %vm1117, %v2126
  %2159 = vst.msk [vmem:[%s7 + $0x170] sm:$0xff] %vm1117, %v2127
  %2160 = vst.msk [vmem:[%s7 + $0x178] sm:$0xff] %vm1117, %v2128
  %2161 = vst.msk [vmem:[%s7 + $0x180] sm:$0xff] %vm1117, %v2129
  %2162 = vst.msk [vmem:[%s7 + $0x188] sm:$0xff] %vm1117, %v2130
  %2163 = vst.msk [vmem:[%s7 + $0x190] sm:$0xff] %vm1117, %v2131
  %2164 = vst.msk [vmem:[%s7 + $0x198] sm:$0xff] %vm1117, %v2132
  %2165 = vst.msk [vmem:[%s7 + $0x1a0] sm:$0xff] %vm1117, %v2133
  %2166 = vst.msk [vmem:[%s7 + $0x1a8] sm:$0xff] %vm1117, %v2134
  %2167 = vst.msk [vmem:[%s7 + $0x1b0] sm:$0xff] %vm1117, %v2135
  %2168 = vst.msk [vmem:[%s7 + $0x1b8] sm:$0xff] %vm1117, %v2136
  %2169 = vst.msk [vmem:[%s7 + $0x1c0] sm:$0xff] %vm1117, %v2137
  %2170 = vst.msk [vmem:[%s7 + $0x1c8] sm:$0xff] %vm1117, %v2138
  %2171 = vst.msk [vmem:[%s7 + $0x1d0] sm:$0xff] %vm1117, %v2139
  %2172 = vst.msk [vmem:[%s7 + $0x1d8] sm:$0xff] %vm1117, %v2140
  %2173 = vst.msk [vmem:[%s7 + $0x1e0] sm:$0xff] %vm1117, %v2141
  %2174 = vst.msk [vmem:[%s7 + $0x1e8] sm:$0xff] %vm1117, %v2142
  %2175 = vst.msk [vmem:[%s7 + $0x1f0] sm:$0xff] %vm1117, %v2143
  %2176 = vst.msk [vmem:[%s7 + $0x1f8] sm:$0xff] %vm1117, %v2144
  // Predicated region
  $region30: #{tpu_custom_call.1} parent=0 // pred_check
    _
  $region31: #{tpu_custom_call.1} parent=0 // pred_check_branch
    %2178 = sbr.rel (0) target = $region33
  $region32: #{tpu_custom_call.1} parent=0 // pred_region
    _
  $region33: #{tpu_custom_call.1} parent=0 // pred_fallthru
    _
  // Predicated region
  $region34: #{tpu_custom_call.1} parent=0 // pred_check
    _
  $region35: #{tpu_custom_call.1} parent=0 // pred_check_branch
    %2180 = sbr.rel (0) target = $region37
  $region36: #{tpu_custom_call.1} parent=0 // pred_region
    _
  $region37: #{tpu_custom_call.1} parent=0 // pred_fallthru
    _

</llo_original>
